<compile_context>
chip_gen: v7x
topology: tpu7x:2x2x1
jax: 0.10.0
libtpu: 0.0.40
codegen_flags: <defaults>
</compile_context>

<pallas_src>
import math
import functools

import jax
import jax.numpy as jnp
from jax import lax
from jax.experimental import pallas as pl
from jax.experimental.pallas import tpu as pltpu


# ----------------------------------------------------------------------------
# VMEM budgeting helpers
# ----------------------------------------------------------------------------
def _vmem_capacity_bytes():
    try:
        cap = int(pltpu.get_tpu_info().vmem_capacity_bytes)
        if cap >= (16 << 20):
            return cap
    except Exception:
        pass
    return 64 << 20                       # conservative default (v7x per-TC VMEM)


def _vmem_limit(needed, cap):
    return int(min(max(needed + (8 << 20), 32 << 20), cap - (4 << 20)))


# ----------------------------------------------------------------------------
# Kernel 1: tiled fused matmul + bias + activation (1x1 Conv1d / Linear)
# ----------------------------------------------------------------------------
def _matmul_bias_act_kernel(x_ref, w_ref, b_ref, o_ref, *, act):
    xb = x_ref[...].astype(jnp.bfloat16)               # bf16 operands for the MXU
    y = jnp.dot(xb, w_ref[...], preferred_element_type=jnp.float32)
    y = y + b_ref[...]
    if act == "relu":
        y = jnp.maximum(y, 0.0)
    elif act == "mish":
        y = y * jnp.tanh(jax.nn.softplus(y))           # f32 elementwise (v5e-safe)
    o_ref[...] = y


def matmul_bias_act(x, w_bf16, b, act="none", tm=None):
    """x: [M, K] f32, w_bf16: [K, N] bf16, b: [N] f32 -> act(x @ w + b): [M, N] f32."""
    M, K = x.shape
    N = w_bf16.shape[1]
    cap = _vmem_capacity_bytes()
    budget = int(cap * 0.55)

    def need(t):
        # double-buffered x block + resident weight/bias + double-buffered out
        # + in-kernel bf16 copy of x and the f32 pre-activation temporary.
        return (2 * t * K * 4 + K * N * 2 + N * 4
                + 2 * t * N * 4 + t * N * 4 + t * K * 2)

    if tm is None:
        tm = 2048
    while tm > 256 and need(tm) > budget:
        tm //= 2
    tm = min(tm, M)
    limit = _vmem_limit(need(tm), cap)

    b2 = b.reshape(1, N)
    return pl.pallas_call(
        functools.partial(_matmul_bias_act_kernel, act=act),
        out_shape=jax.ShapeDtypeStruct((M, N), jnp.float32),
        grid=(pl.cdiv(M, tm),),
        in_specs=[pl.BlockSpec((tm, K), lambda i: (i, 0)),
                  pl.BlockSpec((K, N), lambda i: (0, 0)),     # weight stays resident
                  pl.BlockSpec((1, N), lambda i: (0, 0))],
        out_specs=pl.BlockSpec((tm, N), lambda i: (i, 0)),
        compiler_params=pltpu.CompilerParams(
            dimension_semantics=("parallel",), vmem_limit_bytes=limit),
    )(x, w_bf16, b2)


# ----------------------------------------------------------------------------
# Kernel 2a: ALL residual layers fused in one pallas_call, grid = (B, n_layers)
#   x and skip_sum live in the resident output blocks across the layer axis;
#   cond stays resident per batch element; per-layer weights stream from HBM.
# ----------------------------------------------------------------------------
def _fused_layers_kernel(x_ref, cond_ref, d_ref, wconv_ref, wcond_ref, wout_ref,
                         bz_ref, bout_ref, xout_ref, skip_ref):
    l = pl.program_id(1)
    bf16 = jnp.bfloat16

    @pl.when(l == 0)
    def _():
        xout_ref[...] = x_ref[...]                     # residual stream init
        skip_ref[...] = jnp.zeros_like(skip_ref)       # skip accumulator init

    x = xout_ref[0]                                    # [L, C] f32, VMEM-resident
    d = d_ref[0, 0]                                    # [1, C]  f32
    y = x + d
    n, c = y.shape

    row = lax.broadcasted_iota(jnp.int32, (n, 1), 0)
    zero_row = jnp.zeros((1, c), jnp.float32)
    # pltpu.roll uses the XLU slot (no VMEM copies like concatenate).
    y_m1 = jnp.where(row == 0, zero_row, pltpu.roll(y, shift=1, axis=0))        # y[t-1]
    y_p1 = jnp.where(row == n - 1, zero_row, pltpu.roll(y, shift=n - 1, axis=0))  # y[t+1]

    # k=3 conv + fused conditioner projection, all into one [L, 2C] accumulator.
    z = (jnp.dot(y_m1.astype(bf16), wconv_ref[0], preferred_element_type=jnp.float32)
         + jnp.dot(y.astype(bf16), wconv_ref[1], preferred_element_type=jnp.float32)
         + jnp.dot(y_p1.astype(bf16), wconv_ref[2], preferred_element_type=jnp.float32)
         + jnp.dot(cond_ref[0], wcond_ref[0], preferred_element_type=jnp.float32)
         + bz_ref[0])

    g = jax.nn.sigmoid(z[:, :c]) * jnp.tanh(z[:, c:])
    o = jnp.dot(g.astype(bf16), wout_ref[0],
                preferred_element_type=jnp.float32) + bout_ref[0]               # [L, 2C]

    xout_ref[0] = (x + o[:, :c]) * (1.0 / math.sqrt(2.0))
    skip_ref[0] = skip_ref[0] + o[:, c:]


def _fused_vmem_need(L, C, H):
    blk_io = 3 * L * C * 4 + L * H * 2                       # x in, x/skip out, cond
    wts = ((3 * C + H + C) * 2 * C) * 2 + 2 * 2 * C * 4 + C * 4
    tmp = 2 * (L * 2 * C * 4) + 4 * (L * C * 4)              # z, o + y/y_m1/y_p1/g
    return 2 * (blk_io + wts) + tmp                          # ~double-buffered


def fused_residual_layers(x, cond_bf16, d_all, pp, cap):
    """x: [B,L,C] f32; cond_bf16: [B,L,H] bf16; d_all: [B,n_layers,1,C] f32."""
    B, L, C = x.shape
    H = cond_bf16.shape[-1]
    n_layers = pp["wconv_all"].shape[0]
    limit = _vmem_limit(_fused_vmem_need(L, C, H), cap)

    wconv_flat = pp["wconv_all"].reshape(n_layers * 3, C, 2 * C)

    xl_spec = pl.BlockSpec((1, L, C), lambda b, l: (b, 0, 0))       # resident over l
    cond_spec = pl.BlockSpec((1, L, H), lambda b, l: (b, 0, 0))     # resident over l
    d_spec = pl.BlockSpec((1, 1, 1, C), lambda b, l: (b, l, 0, 0))
    wconv_spec = pl.BlockSpec((3, C, 2 * C), lambda b, l: (l, 0, 0))
    wcond_spec = pl.BlockSpec((1, H, 2 * C), lambda b, l: (l, 0, 0))
    wout_spec = pl.BlockSpec((1, C, 2 * C), lambda b, l: (l, 0, 0))
    b_spec = pl.BlockSpec((1, 1, 2 * C), lambda b, l: (l, 0, 0))

    xnew, skip = pl.pallas_call(
        _fused_layers_kernel,
        out_shape=(jax.ShapeDtypeStruct((B, L, C), jnp.float32),
                   jax.ShapeDtypeStruct((B, L, C), jnp.float32)),
        grid=(B, n_layers),
        in_specs=[xl_spec, cond_spec, d_spec, wconv_spec, wcond_spec, wout_spec,
                  b_spec, b_spec],
        out_specs=[xl_spec, xl_spec],
        compiler_params=pltpu.CompilerParams(
            dimension_semantics=("parallel", "arbitrary"),
            vmem_limit_bytes=limit),
    )(x, cond_bf16, d_all, wconv_flat, pp["wcond_all"], pp["wout_all"],
      pp["bz_all"], pp["bout_all"])
    return xnew, skip


# ----------------------------------------------------------------------------
# Kernel 2b (fallback for long sequences): per-layer residual block,
# grid = (B, L // TL) with 1-row halos; x and skip_sum updated in place.
# ----------------------------------------------------------------------------
def _residual_block_kernel(x_ref, cond_ref, prev_ref, next_ref, d_ref, skipin_ref,
                           wconv_ref, wcond_ref, wout_ref, bz_ref, bout_ref,
                           xnew_ref, skipout_ref):
    t = pl.program_id(1)
    n_t = pl.num_programs(1)
    bf16 = jnp.bfloat16

    x = x_ref[0]                                   # [TL, C] f32
    d = d_ref[0]                                   # [1, C]  f32
    y = x + d
    tl_, c = y.shape

    # Halo rows of y. True sequence boundaries use the conv's zero padding
    # (padding applies to y = x + d, so the padded row is 0, not d).
    prev_y = (prev_ref[0, 0] + d) * (t != 0).astype(jnp.float32)
    next_y = (next_ref[0, 0] + d) * (t != n_t - 1).astype(jnp.float32)

    row = lax.broadcasted_iota(jnp.int32, (tl_, 1), 0)
    y_m1 = jnp.where(row == 0, prev_y, pltpu.roll(y, shift=1, axis=0))
    y_p1 = jnp.where(row == tl_ - 1, next_y, pltpu.roll(y, shift=tl_ - 1, axis=0))

    z = (jnp.dot(y_m1.astype(bf16), wconv_ref[0], preferred_element_type=jnp.float32)
         + jnp.dot(y.astype(bf16), wconv_ref[1], preferred_element_type=jnp.float32)
         + jnp.dot(y_p1.astype(bf16), wconv_ref[2], preferred_element_type=jnp.float32)
         + jnp.dot(cond_ref[0], wcond_ref[...], preferred_element_type=jnp.float32)
         + bz_ref[...])

    g = jax.nn.sigmoid(z[:, :c]) * jnp.tanh(z[:, c:])
    o = jnp.dot(g.astype(bf16), wout_ref[...],
                preferred_element_type=jnp.float32) + bout_ref[...]

    xnew_ref[0] = (x + o[:, :c]) * (1.0 / math.sqrt(2.0))
    skipout_ref[0] = skipin_ref[0] + o[:, c:]


def _tiled_vmem_need(tl, C, H):
    work = 4 * tl * C * 4 + tl * H * 2 + 3 * C * 4 + 2 * (2 * C) * 4
    wts = (3 * C * 2 * C + H * 2 * C + C * 2 * C) * 2
    tmp = 2 * (tl * 2 * C * 4) + 4 * (tl * C * 4)            # z, o + y/y_m1/y_p1/g
    return 2 * work + 2 * wts + tmp


def _derive_tl(B, L, C, H, budget):
    cands = [t for t in range(L, 7, -8) if L % t == 0 and (t == L or t % 8 == 0)]
    if not cands:
        return L
    fitting = [t for t in cands if _tiled_vmem_need(t, C, H) <= budget]
    if fitting:
        # Prefer >=2 grid steps so both v7x TensorCores get work.
        pref = [t for t in fitting if B * (L // t) >= 2]
        return pref[0] if pref else fitting[0]
    return cands[-1]                                          # best effort


def residual_block_tiled(x, cond_bf16, d_proj, skip_sum,
                         wconv, wcond, wout, bz, bout, tl=None, cap=None):
    B, L, C = x.shape
    H = cond_bf16.shape[-1]
    if cap is None:
        cap = _vmem_capacity_bytes()
    budget = int(cap * 0.7)

    if tl is None or tl <= 0 or L % tl != 0 or (tl % 8 != 0 and tl != L):
        tl = _derive_tl(B, L, C, H, budget)
    n_t = L // tl

    # 1-row halos across L-tile boundaries (separate HBM arrays, so aliasing x
    # in place is hazard-free; true sequence ends are zero-masked in-kernel).
    bound_hi = x[:, tl - 1::tl, :]
    prev_halo = jnp.concatenate(
        [jnp.zeros((B, 1, C), x.dtype), bound_hi[:, :n_t - 1, :]], axis=1).reshape(B, n_t, 1, C)
    bound_lo = x[:, tl::tl, :]
    next_halo = jnp.concatenate(
        [bound_lo, jnp.zeros((B, 1, C), x.dtype)], axis=1).reshape(B, n_t, 1, C)

    d3 = d_proj.reshape(B, 1, C)
    bz2 = bz.reshape(1, 2 * C)
    bout2 = bout.reshape(1, 2 * C)

    limit = _vmem_limit(_tiled_vmem_need(tl, C, H), cap)

    x_spec = pl.BlockSpec((1, tl, C), lambda b, t: (b, t, 0))
    cond_spec = pl.BlockSpec((1, tl, H), lambda b, t: (b, t, 0))
    halo_spec = pl.BlockSpec((1, 1, 1, C), lambda b, t: (b, t, 0, 0))
    d_spec = pl.BlockSpec((1, 1, C), lambda b, t: (b, 0, 0))
    w3_spec = pl.BlockSpec((3, C, 2 * C), lambda b, t: (0, 0, 0))
    wc_spec = pl.BlockSpec((H, 2 * C), lambda b, t: (0, 0))
    wo_spec = pl.BlockSpec((C, 2 * C), lambda b, t: (0, 0))
    b_spec = pl.BlockSpec((1, 2 * C), lambda b, t: (0, 0))

    xnew, skip_new = pl.pallas_call(
        _residual_block_kernel,
        out_shape=(jax.ShapeDtypeStruct((B, L, C), jnp.float32),
                   jax.ShapeDtypeStruct((B, L, C), jnp.float32)),
        grid=(B, n_t),
        in_specs=[x_spec, cond_spec, halo_spec, halo_spec, d_spec, x_spec,
                  w3_spec, wc_spec, wo_spec, b_spec, b_spec],
        out_specs=[x_spec, x_spec],
        input_output_aliases={0: 0, 5: 1},      # x and skip_sum updated in place
        compiler_params=pltpu.CompilerParams(
            dimension_semantics=("parallel", "parallel"),
            vmem_limit_bytes=limit),
    )(x, cond_bf16, prev_halo, next_halo, d3, skip_sum,
      wconv, wcond, wout, bz2, bout2)
    return xnew, skip_new


# ----------------------------------------------------------------------------
# Kernel 3: fused skip projection (relu) + final output projection
#   hidden = relu(skip_sum @ w_sp + b_sp); out = hidden @ w_op_pad + b_op_pad
#   (w_op output padded to a 128-lane multiple -> lane-dense stores)
# ----------------------------------------------------------------------------
def _skip_out_kernel(s_ref, wsp_ref, bsp_ref, wop_ref, bop_ref, hid_ref, out_ref):
    h = jnp.dot(s_ref[...].astype(jnp.bfloat16), wsp_ref[...],
                preferred_element_type=jnp.float32) + bsp_ref[...]
    h = jnp.maximum(h, 0.0)
    hid_ref[...] = h
    out_ref[...] = (jnp.dot(h.astype(jnp.bfloat16), wop_ref[...],
                            preferred_element_type=jnp.float32) + bop_ref[...])


def skip_output_projection(s, pp, cap):
    """s: [M, C] f32 -> (hidden [M, C] f32, out_padded [M, Npad] f32)."""
    M, C = s.shape
    Npad = pp["w_op_pad"].shape[1]
    budget = int(cap * 0.55)

    def need(t):
        return (2 * t * C * 4 + C * C * 2 + C * Npad * 2 + 2 * C * 4 + Npad * 4
                + 2 * t * C * 4 + 2 * t * Npad * 4 + t * C * 2 + t * Npad * 2)

    tm = 2048
    while tm > 256 and need(tm) > budget:
        tm //= 2
    tm = min(tm, M)
    limit = _vmem_limit(need(tm), cap)

    hidden, out = pl.pallas_call(
        _skip_out_kernel,
        out_shape=(jax.ShapeDtypeStruct((M, C), jnp.float32),
                   jax.ShapeDtypeStruct((M, Npad), jnp.float32)),
        grid=(pl.cdiv(M, tm),),
        in_specs=[pl.BlockSpec((tm, C), lambda i: (i, 0)),
                  pl.BlockSpec((C, C), lambda i: (0, 0)),
                  pl.BlockSpec((1, C), lambda i: (0, 0)),
                  pl.BlockSpec((C, Npad), lambda i: (0, 0)),
                  pl.BlockSpec((1, Npad), lambda i: (0, 0))],
        out_specs=[pl.BlockSpec((tm, C), lambda i: (i, 0)),
                   pl.BlockSpec((tm, Npad), lambda i: (i, 0))],
        compiler_params=pltpu.CompilerParams(
            dimension_semantics=("parallel",), vmem_limit_bytes=limit),
    )(s, pp["w_sp"], pp["b_sp"].reshape(1, C),
      pp["w_op_pad"], pp["b_op_pad"].reshape(1, Npad))
    return hidden, out


# ----------------------------------------------------------------------------
# Parameters, sinusoidal embedding, full forward
# ----------------------------------------------------------------------------
def init_params(key, in_dims, n_layers, n_chans, n_hidden):
    keys = iter(jax.random.split(key, 16 + 8 * n_layers))

    def nrm(shape, scale):
        return scale * jax.random.normal(next(keys), shape, jnp.float32)

    C = n_chans
    p = {}
    p["w_ip"] = nrm((in_dims, C), math.sqrt(2.0 / in_dims))       # kaiming (Conv1d subclass)
    p["b_ip"] = nrm((C,), 0.1)
    p["w_mlp1"] = nrm((C, 4 * C), 1.0 / math.sqrt(C))
    p["b_mlp1"] = nrm((4 * C,), 0.1)
    p["w_mlp2"] = nrm((4 * C, C), 1.0 / math.sqrt(4 * C))
    p["b_mlp2"] = nrm((C,), 0.1)
    layers = []
    for _ in range(n_layers):
        lp = {}
        lp["wconv"] = nrm((3, C, 2 * C), 1.0 / math.sqrt(3 * C))  # [tap, Cin, Cout]
        lp["bconv"] = nrm((2 * C,), 0.1)
        lp["wd"] = nrm((C, C), 1.0 / math.sqrt(C))
        lp["bd"] = nrm((C,), 0.1)
        lp["wc"] = nrm((n_hidden, 2 * C), 1.0 / math.sqrt(n_hidden))
        lp["bc"] = nrm((2 * C,), 0.1)
        lp["wo"] = nrm((C, 2 * C), 1.0 / math.sqrt(C))
        lp["bo"] = nrm((2 * C,), 0.1)
        layers.append(lp)
    p["layers"] = layers
    p["w_sp"] = nrm((C, C), math.sqrt(2.0 / C))                   # kaiming (Conv1d subclass)
    p["b_sp"] = nrm((C,), 0.1)
    p["w_op"] = jnp.zeros((C, in_dims), jnp.float32)              # nn.init.zeros_
    p["b_op"] = nrm((in_dims,), 0.1)
    return p


def prepare_pallas_params(p):
    """Pack params for the kernels: bf16 MXU weights, fused conv+cond biases,
    layer-stacked weights, stacked diffusion projections, 1/sqrt(n_layers)
    folded into w_sp, w_op zero-padded to a 128-lane output."""
    n_layers = len(p["layers"])
    C = p["w_ip"].shape[1]
    in_dims = p["w_op"].shape[1]
    q = {}
    q["w_ip"] = p["w_ip"].astype(jnp.bfloat16)
    q["b_ip"] = p["b_ip"]
    q["w_mlp1"] = p["w_mlp1"].astype(jnp.bfloat16)
    q["b_mlp1"] = p["b_mlp1"]
    q["w_mlp2"] = p["w_mlp2"].astype(jnp.bfloat16)
    q["b_mlp2"] = p["b_mlp2"]
    q["w_d_all"] = jnp.concatenate([lp["wd"] for lp in p["layers"]],
                                   axis=1).astype(jnp.bfloat16)         # [C, n_layers*C]
    q["b_d_all"] = jnp.concatenate([lp["bd"] for lp in p["layers"]], axis=0)
    q["wconv_all"] = jnp.stack([lp["wconv"] for lp in p["layers"]]).astype(jnp.bfloat16)
    q["wcond_all"] = jnp.stack([lp["wc"] for lp in p["layers"]]).astype(jnp.bfloat16)
    q["wout_all"] = jnp.stack([lp["wo"] for lp in p["layers"]]).astype(jnp.bfloat16)
    q["bz_all"] = jnp.stack([(lp["bconv"] + lp["bc"]).reshape(1, 2 * C)
                             for lp in p["layers"]])                    # conv+cond bias fused
    q["bout_all"] = jnp.stack([lp["bo"].reshape(1, 2 * C) for lp in p["layers"]])
    q["w_sp"] = (p["w_sp"] / math.sqrt(n_layers)).astype(jnp.bfloat16)
    q["b_sp"] = p["b_sp"]
    n_pad = max(128, ((in_dims + 127) // 128) * 128)
    w_op_pad = jnp.zeros((C, n_pad), jnp.float32).at[:, :in_dims].set(p["w_op"])
    b_op_pad = jnp.zeros((n_pad,), jnp.float32).at[:in_dims].set(p["b_op"])
    q["w_op_pad"] = w_op_pad.astype(jnp.bfloat16)
    q["b_op_pad"] = b_op_pad
    return q


def sinusoidal_emb(steps, dim):
    half = dim // 2
    scale = math.log(10000.0) / (half - 1)
    freqs = jnp.exp(jnp.arange(half, dtype=jnp.float32) * (-scale))
    args = steps[:, None] * freqs[None, :]
    return jnp.concatenate([jnp.sin(args), jnp.cos(args)], axis=-1)


def wavenet_forward(pp, spec, diffusion_step, cond, tl=None, force_tiled=False):
    """pp: prepared params; spec: [B,1,L,in_dims]; diffusion_step: [B];
       cond: [B,L,n_hidden].  Returns (out [B,L,in_dims], hidden [B,L,C])."""
    B, _, L, in_dims = spec.shape
    C = pp["w_ip"].shape[1]
    H = cond.shape[-1]
    n_layers = pp["wconv_all"].shape[0]
    cap = _vmem_capacity_bytes()

    # input 1x1 conv + relu
    x = matmul_bias_act(spec[:, 0].reshape(B * L, in_dims),
                        pp["w_ip"], pp["b_ip"], act="relu").reshape(B, L, C)

    # diffusion embedding -> Linear -> Mish -> Linear
    demb = sinusoidal_emb(diffusion_step, C)
    h = matmul_bias_act(demb, pp["w_mlp1"], pp["b_mlp1"], act="mish")
    d = matmul_bias_act(h, pp["w_mlp2"], pp["b_mlp2"], act="none")          # [B, C]

    # all per-layer diffusion projections in one launch -> [B, n_layers, 1, C]
    d_all = matmul_bias_act(d, pp["w_d_all"], pp["b_d_all"], act="none")
    d_all = d_all.reshape(B, n_layers, 1, C)

    cond_bf16 = cond.astype(jnp.bfloat16)   # cast once; resident per batch element

    if (not force_tiled) and _fused_vmem_need(L, C, H) <= int(cap * 0.7):
        # All layers fused: x/skip stay in VMEM, only weights stream from HBM.
        x, skip_sum = fused_residual_layers(x, cond_bf16, d_all, pp, cap)
    else:
        # TODO(synk): grouped-layer fusion with G-row halo recompute for the
        # tiled (whole-L does not fit VMEM) path; per-layer tiled blocks here.
        skip_sum = jnp.zeros((B, L, C), jnp.float32)
        for i in range(n_layers):
            x, skip_sum = residual_block_tiled(
                x, cond_bf16, d_all[:, i, 0, :], skip_sum,
                pp["wconv_all"][i], pp["wcond_all"][i], pp["wout_all"][i],
                pp["bz_all"][i, 0], pp["bout_all"][i, 0], tl=tl, cap=cap)

    # fused skip projection + relu + final output projection (lane-dense pad)
    hidden, out_pad = skip_output_projection(skip_sum.reshape(B * L, C), pp, cap)
    out = out_pad[:, :in_dims]
    return out.reshape(B, L, in_dims), hidden.reshape(B, L, C)


# ----------------------------------------------------------------------------
# Pure-JAX reference (same channels-last math, same bf16-operand / f32-acc
# matmul convention) for validation
# ----------------------------------------------------------------------------
def reference_forward(params, spec, diffusion_step, cond):
    B, _, L, in_dims = spec.shape
    C = params["w_ip"].shape[1]
    bf16 = jnp.bfloat16

    def mm(a, w):
        return jnp.dot(a.astype(bf16), w.astype(bf16),
                       preferred_element_type=jnp.float32)

    x = jax.nn.relu(mm(spec[:, 0], params["w_ip"]) + params["b_ip"])        # [B, L, C]

    demb = sinusoidal_emb(diffusion_step, C)
    h = mm(demb, params["w_mlp1"]) + params["b_mlp1"]
    h = h * jnp.tanh(jax.nn.softplus(h))
    d = mm(h, params["w_mlp2"]) + params["b_mlp2"]                          # [B, C]

    skip_sum = jnp.zeros((B, L, C), jnp.float32)
    for lp in params["layers"]:
        dp = mm(d, lp["wd"]) + lp["bd"]                                     # [B, C]
        cp = mm(cond, lp["wc"]) + lp["bc"]                                  # [B, L, 2C]
        y = x + dp[:, None, :]
        y_m1 = jnp.pad(y, ((0, 0), (1, 0), (0, 0)))[:, :L, :]
        y_p1 = jnp.pad(y, ((0, 0), (0, 1), (0, 0)))[:, 1:, :]
        z = (mm(y_m1, lp["wconv"][0]) + mm(y, lp["wconv"][1])
             + mm(y_p1, lp["wconv"][2]) + lp["bconv"] + cp)
        g = jax.nn.sigmoid(z[..., :C]) * jnp.tanh(z[..., C:])
        o = mm(g, lp["wo"]) + lp["bo"]
        x = (x + o[..., :C]) / math.sqrt(2.0)
        skip_sum = skip_sum + o[..., C:]

    xs = skip_sum / math.sqrt(len(params["layers"]))
    hidden = jax.nn.relu(mm(xs, params["w_sp"]) + params["b_sp"])
    out = hidden @ params["w_op"] + params["b_op"]
    return out, hidden


if __name__ == "__main__":
    in_dims, n_layers, n_chans, n_hidden = 8, 3, 32, 16
    B, L = 2, 16

    key = jax.random.PRNGKey(0)
    kp, ks, kc = jax.random.split(key, 3)
    params = init_params(kp, in_dims, n_layers, n_chans, n_hidden)
    pp = prepare_pallas_params(params)

    spec = jax.random.normal(ks, (B, 1, L, in_dims), jnp.float32)
    diffusion_step = jnp.array([3.0, 17.0], jnp.float32)                    # [B]
    cond = jax.random.normal(kc, (B, L, n_hidden), jnp.float32)

    ref_out, ref_hidden = reference_forward(params, spec, diffusion_step, cond)

    # Path 1: fused multi-layer residual kernel (default, fits VMEM here).
    fwd = jax.jit(wavenet_forward)
    out, hidden = fwd(pp, spec, diffusion_step, cond)
    out = jax.block_until_ready(out)
    hidden = jax.block_until_ready(hidden)
    assert out.shape == (B, L, in_dims) and hidden.shape == (B, L, n_chans)
    err_h = float(jnp.max(jnp.abs(hidden - ref_hidden)))
    err_o = float(jnp.max(jnp.abs(out - ref_out)))
    if err_h > 8e-2 or err_o > 8e-2:
        raise AssertionError(f"fused path mismatch: hidden={err_h}, out={err_o}")

    # Path 2: per-layer L-tiled fallback (tl=8 exercises halos + in-place x/skip).
    fwd_t = jax.jit(functools.partial(wavenet_forward, tl=8, force_tiled=True))
    out2, hidden2 = fwd_t(pp, spec, diffusion_step, cond)
    out2 = jax.block_until_ready(out2)
    hidden2 = jax.block_until_ready(hidden2)
    err_h2 = float(jnp.max(jnp.abs(hidden2 - ref_hidden)))
    err_o2 = float(jnp.max(jnp.abs(out2 - ref_out)))
    if err_h2 > 8e-2 or err_o2 > 8e-2:
        raise AssertionError(f"tiled path mismatch: hidden={err_h2}, out={err_o2}")

    print("KERNEL_OK")
</pallas_src>

<mosaic_0001>
module attributes {stable_mosaic.version = 11 : i64} {
  func.func @_matmul_bias_act_kernel(%arg0: i32, %arg1: memref<2x32xf32, #tpu.memory_space<vmem>>, %arg2: memref<32x128xbf16, #tpu.memory_space<vmem>>, %arg3: memref<1x128xf32, #tpu.memory_space<vmem>>, %arg4: memref<2x128xf32, #tpu.memory_space<vmem>>) attributes {dimension_semantics = [#tpu.dimension_semantics<parallel>], iteration_bounds = array<i64: 1>, scalar_prefetch = 0 : i64, scratch_operands = 0 : i64, tpu.core_type = #tpu.core_type<tc>, window_params = [{transform_indices = @transform_0, window_bounds = array<i64: 2, 32>}, {pipeline_mode = #tpu.pipeline_mode<synchronous>, transform_indices = @transform_1, window_bounds = array<i64: 32, 128>}, {pipeline_mode = #tpu.pipeline_mode<synchronous>, transform_indices = @transform_2, window_bounds = array<i64: 1, 128>}, {transform_indices = @transform_3, window_bounds = array<i64: 2, 128>}]} {
    %c0 = arith.constant 0 : index
    %c0_0 = arith.constant 0 : index
    %0 = vector.load %arg1[%c0, %c0_0] : memref<2x32xf32, #tpu.memory_space<vmem>>, vector<2x32xf32>
    %1 = arith.truncf %0 : vector<2x32xf32> to vector<2x32xbf16>
    %c0_1 = arith.constant 0 : index
    %c0_2 = arith.constant 0 : index
    %2 = vector.load %arg2[%c0_1, %c0_2] : memref<32x128xbf16, #tpu.memory_space<vmem>>, vector<32x128xbf16>
    %cst = arith.constant dense<0.000000e+00> : vector<2x128xf32>
    %3 = tpu.matmul %1, %2, %cst {dimension_numbers = #tpu.dot_dimension_numbers<[1], [0], [0], [1], [0, 0, 1, 1], [], []>} : vector<2x32xbf16>, vector<32x128xbf16>, vector<2x128xf32> -> vector<2x128xf32>
    %c0_3 = arith.constant 0 : index
    %c0_4 = arith.constant 0 : index
    %4 = vector.load %arg3[%c0_3, %c0_4] : memref<1x128xf32, #tpu.memory_space<vmem>>, vector<1x128xf32>
    %5 = vector.broadcast %4 : vector<1x128xf32> to vector<2x128xf32>
    %6 = arith.addf %3, %5 : vector<2x128xf32>
    %cst_5 = arith.constant 0.000000e+00 : f32
    %7 = vector.broadcast %cst_5 : f32 to vector<2x128xf32>
    %8 = arith.maximumf %6, %7 : vector<2x128xf32>
    %9 = vector.broadcast %cst_5 : f32 to vector<2x128xf32>
    %10 = arith.subf %6, %9 : vector<2x128xf32>
    %11 = arith.cmpf one, %10, %10 : vector<2x128xf32>
    %12 = vector.broadcast %cst_5 : f32 to vector<2x128xf32>
    %13 = arith.addf %6, %12 : vector<2x128xf32>
    %14 = math.absf %10 : vector<2x128xf32>
    %cst_6 = arith.constant 0.000000e+00 : f32
    %15 = vector.broadcast %cst_6 : f32 to vector<2x128xf32>
    %16 = arith.subf %15, %14 : vector<2x128xf32>
    %17 = math.exp %16 : vector<2x128xf32>
    %18 = math.log1p %17 : vector<2x128xf32>
    %19 = arith.addf %8, %18 : vector<2x128xf32>
    %20 = arith.select %11, %13, %19 : vector<2x128xi1>, vector<2x128xf32>
    %21 = math.tanh %20 : vector<2x128xf32>
    %22 = arith.mulf %6, %21 : vector<2x128xf32>
    %c0_7 = arith.constant 0 : index
    %c0_8 = arith.constant 0 : index
    %23 = vector.load %arg4[%c0_7, %c0_8] : memref<2x128xf32, #tpu.memory_space<vmem>>, vector<2x128xf32>
    tpu.vector_store %arg4[%c0_7, %c0_8], %22 {strides = array<i32>} : memref<2x128xf32, #tpu.memory_space<vmem>>, vector<2x128xf32>,
    return
  }
  func.func @transform_0(%arg0: i32) -> (i32, i32) {
    %c0_i32 = arith.constant 0 : i32
    %c0_i32_0 = arith.constant 0 : i32
    return %arg0, %c0_i32 : i32, i32
  }
  func.func @transform_1(%arg0: i32) -> (i32, i32) {
    %c0_i32 = arith.constant 0 : i32
    %c0_i32_0 = arith.constant 0 : i32
    %c0_i32_1 = arith.constant 0 : i32
    return %c0_i32, %c0_i32_0 : i32, i32
  }
  func.func @transform_2(%arg0: i32) -> (i32, i32) {
    %c0_i32 = arith.constant 0 : i32
    %c0_i32_0 = arith.constant 0 : i32
    %c0_i32_1 = arith.constant 0 : i32
    return %c0_i32, %c0_i32_0 : i32, i32
  }
  func.func @transform_3(%arg0: i32) -> (i32, i32) {
    %c0_i32 = arith.constant 0 : i32
    %c0_i32_0 = arith.constant 0 : i32
    return %arg0, %c0_i32 : i32, i32
  }
}

module attributes {stable_mosaic.version = 11 : i64} {
  func.func @_matmul_bias_act_kernel(%arg0: i32, %arg1: memref<32x8xf32, #tpu.memory_space<vmem>>, %arg2: memref<8x32xbf16, #tpu.memory_space<vmem>>, %arg3: memref<1x32xf32, #tpu.memory_space<vmem>>, %arg4: memref<32x32xf32, #tpu.memory_space<vmem>>) attributes {dimension_semantics = [#tpu.dimension_semantics<parallel>], iteration_bounds = array<i64: 1>, scalar_prefetch = 0 : i64, scratch_operands = 0 : i64, tpu.core_type = #tpu.core_type<tc>, window_params = [{transform_indices = @transform_0, window_bounds = array<i64: 32, 8>}, {pipeline_mode = #tpu.pipeline_mode<synchronous>, transform_indices = @transform_1, window_bounds = array<i64: 8, 32>}, {pipeline_mode = #tpu.pipeline_mode<synchronous>, transform_indices = @transform_2, window_bounds = array<i64: 1, 32>}, {transform_indices = @transform_3, window_bounds = array<i64: 32, 32>}]} {
    %c0 = arith.constant 0 : index
    %c0_0 = arith.constant 0 : index
    %0 = vector.load %arg1[%c0, %c0_0] : memref<32x8xf32, #tpu.memory_space<vmem>>, vector<32x8xf32>
    %1 = arith.truncf %0 : vector<32x8xf32> to vector<32x8xbf16>
    %c0_1 = arith.constant 0 : index
    %c0_2 = arith.constant 0 : index
    %2 = vector.load %arg2[%c0_1, %c0_2] : memref<8x32xbf16, #tpu.memory_space<vmem>>, vector<8x32xbf16>
    %cst = arith.constant dense<0.000000e+00> : vector<32x32xf32>
    %3 = tpu.matmul %1, %2, %cst {dimension_numbers = #tpu.dot_dimension_numbers<[1], [0], [0], [1], [0, 0, 1, 1], [], []>} : vector<32x8xbf16>, vector<8x32xbf16>, vector<32x32xf32> -> vector<32x32xf32>
    %c0_3 = arith.constant 0 : index
    %c0_4 = arith.constant 0 : index
    %4 = vector.load %arg3[%c0_3, %c0_4] : memref<1x32xf32, #tpu.memory_space<vmem>>, vector<1x32xf32>
    %5 = vector.broadcast %4 : vector<1x32xf32> to vector<32x32xf32>
    %6 = arith.addf %3, %5 : vector<32x32xf32>
    %cst_5 = arith.constant 0.000000e+00 : f32
    %7 = vector.broadcast %cst_5 : f32 to vector<32x32xf32>
    %8 = arith.maximumf %6, %7 : vector<32x32xf32>
    %c0_6 = arith.constant 0 : index
    %c0_7 = arith.constant 0 : index
    %9 = vector.load %arg4[%c0_6, %c0_7] : memref<32x32xf32, #tpu.memory_space<vmem>>, vector<32x32xf32>
    tpu.vector_store %arg4[%c0_6, %c0_7], %8 {strides = array<i32>} : memref<32x32xf32, #tpu.memory_space<vmem>>, vector<32x32xf32>,
    return
  }
  func.func @transform_0(%arg0: i32) -> (i32, i32) {
    %c0_i32 = arith.constant 0 : i32
    %c0_i32_0 = arith.constant 0 : i32
    return %arg0, %c0_i32 : i32, i32
  }
  func.func @transform_1(%arg0: i32) -> (i32, i32) {
    %c0_i32 = arith.constant 0 : i32
    %c0_i32_0 = arith.constant 0 : i32
    %c0_i32_1 = arith.constant 0 : i32
    return %c0_i32, %c0_i32_0 : i32, i32
  }
  func.func @transform_2(%arg0: i32) -> (i32, i32) {
    %c0_i32 = arith.constant 0 : i32
    %c0_i32_0 = arith.constant 0 : i32
    %c0_i32_1 = arith.constant 0 : i32
    return %c0_i32, %c0_i32_0 : i32, i32
  }
  func.func @transform_3(%arg0: i32) -> (i32, i32) {
    %c0_i32 = arith.constant 0 : i32
    %c0_i32_0 = arith.constant 0 : i32
    return %arg0, %c0_i32 : i32, i32
  }
}

module attributes {stable_mosaic.version = 11 : i64} {
  func.func @_matmul_bias_act_kernel(%arg0: i32, %arg1: memref<2x128xf32, #tpu.memory_space<vmem>>, %arg2: memref<128x32xbf16, #tpu.memory_space<vmem>>, %arg3: memref<1x32xf32, #tpu.memory_space<vmem>>, %arg4: memref<2x32xf32, #tpu.memory_space<vmem>>) attributes {dimension_semantics = [#tpu.dimension_semantics<parallel>], iteration_bounds = array<i64: 1>, scalar_prefetch = 0 : i64, scratch_operands = 0 : i64, tpu.core_type = #tpu.core_type<tc>, window_params = [{transform_indices = @transform_0, window_bounds = array<i64: 2, 128>}, {pipeline_mode = #tpu.pipeline_mode<synchronous>, transform_indices = @transform_1, window_bounds = array<i64: 128, 32>}, {pipeline_mode = #tpu.pipeline_mode<synchronous>, transform_indices = @transform_2, window_bounds = array<i64: 1, 32>}, {transform_indices = @transform_3, window_bounds = array<i64: 2, 32>}]} {
    %c0 = arith.constant 0 : index
    %c0_0 = arith.constant 0 : index
    %0 = vector.load %arg1[%c0, %c0_0] : memref<2x128xf32, #tpu.memory_space<vmem>>, vector<2x128xf32>
    %1 = arith.truncf %0 : vector<2x128xf32> to vector<2x128xbf16>
    %c0_1 = arith.constant 0 : index
    %c0_2 = arith.constant 0 : index
    %2 = vector.load %arg2[%c0_1, %c0_2] : memref<128x32xbf16, #tpu.memory_space<vmem>>, vector<128x32xbf16>
    %cst = arith.constant dense<0.000000e+00> : vector<2x32xf32>
    %3 = tpu.matmul %1, %2, %cst {dimension_numbers = #tpu.dot_dimension_numbers<[1], [0], [0], [1], [0, 0, 1, 1], [], []>} : vector<2x128xbf16>, vector<128x32xbf16>, vector<2x32xf32> -> vector<2x32xf32>
    %c0_3 = arith.constant 0 : index
    %c0_4 = arith.constant 0 : index
    %4 = vector.load %arg3[%c0_3, %c0_4] : memref<1x32xf32, #tpu.memory_space<vmem>>, vector<1x32xf32>
    %5 = vector.broadcast %4 : vector<1x32xf32> to vector<2x32xf32>
    %6 = arith.addf %3, %5 : vector<2x32xf32>
    %c0_5 = arith.constant 0 : index
    %c0_6 = arith.constant 0 : index
    %7 = vector.load %arg4[%c0_5, %c0_6] : memref<2x32xf32, #tpu.memory_space<vmem>>, vector<2x32xf32>
    tpu.vector_store %arg4[%c0_5, %c0_6], %6 {strides = array<i32>} : memref<2x32xf32, #tpu.memory_space<vmem>>, vector<2x32xf32>,
    return
  }
  func.func @transform_0(%arg0: i32) -> (i32, i32) {
    %c0_i32 = arith.constant 0 : i32
    %c0_i32_0 = arith.constant 0 : i32
    return %arg0, %c0_i32 : i32, i32
  }
  func.func @transform_1(%arg0: i32) -> (i32, i32) {
    %c0_i32 = arith.constant 0 : i32
    %c0_i32_0 = arith.constant 0 : i32
    %c0_i32_1 = arith.constant 0 : i32
    return %c0_i32, %c0_i32_0 : i32, i32
  }
  func.func @transform_2(%arg0: i32) -> (i32, i32) {
    %c0_i32 = arith.constant 0 : i32
    %c0_i32_0 = arith.constant 0 : i32
    %c0_i32_1 = arith.constant 0 : i32
    return %c0_i32, %c0_i32_0 : i32, i32
  }
  func.func @transform_3(%arg0: i32) -> (i32, i32) {
    %c0_i32 = arith.constant 0 : i32
    %c0_i32_0 = arith.constant 0 : i32
    return %arg0, %c0_i32 : i32, i32
  }
}

module attributes {stable_mosaic.version = 11 : i64} {
  func.func @_matmul_bias_act_kernel(%arg0: i32, %arg1: memref<2x32xf32, #tpu.memory_space<vmem>>, %arg2: memref<32x96xbf16, #tpu.memory_space<vmem>>, %arg3: memref<1x96xf32, #tpu.memory_space<vmem>>, %arg4: memref<2x96xf32, #tpu.memory_space<vmem>>) attributes {dimension_semantics = [#tpu.dimension_semantics<parallel>], iteration_bounds = array<i64: 1>, scalar_prefetch = 0 : i64, scratch_operands = 0 : i64, tpu.core_type = #tpu.core_type<tc>, window_params = [{transform_indices = @transform_0, window_bounds = array<i64: 2, 32>}, {pipeline_mode = #tpu.pipeline_mode<synchronous>, transform_indices = @transform_1, window_bounds = array<i64: 32, 96>}, {pipeline_mode = #tpu.pipeline_mode<synchronous>, transform_indices = @transform_2, window_bounds = array<i64: 1, 96>}, {transform_indices = @transform_3, window_bounds = array<i64: 2, 96>}]} {
    %c0 = arith.constant 0 : index
    %c0_0 = arith.constant 0 : index
    %0 = vector.load %arg1[%c0, %c0_0] : memref<2x32xf32, #tpu.memory_space<vmem>>, vector<2x32xf32>
    %1 = arith.truncf %0 : vector<2x32xf32> to vector<2x32xbf16>
    %c0_1 = arith.constant 0 : index
    %c0_2 = arith.constant 0 : index
    %2 = vector.load %arg2[%c0_1, %c0_2] : memref<32x96xbf16, #tpu.memory_space<vmem>>, vector<32x96xbf16>
    %cst = arith.constant dense<0.000000e+00> : vector<2x96xf32>
    %3 = tpu.matmul %1, %2, %cst {dimension_numbers = #tpu.dot_dimension_numbers<[1], [0], [0], [1], [0, 0, 1, 1], [], []>} : vector<2x32xbf16>, vector<32x96xbf16>, vector<2x96xf32> -> vector<2x96xf32>
    %c0_3 = arith.constant 0 : index
    %c0_4 = arith.constant 0 : index
    %4 = vector.load %arg3[%c0_3, %c0_4] : memref<1x96xf32, #tpu.memory_space<vmem>>, vector<1x96xf32>
    %5 = vector.broadcast %4 : vector<1x96xf32> to vector<2x96xf32>
    %6 = arith.addf %3, %5 : vector<2x96xf32>
    %c0_5 = arith.constant 0 : index
    %c0_6 = arith.constant 0 : index
    %7 = vector.load %arg4[%c0_5, %c0_6] : memref<2x96xf32, #tpu.memory_space<vmem>>, vector<2x96xf32>
    tpu.vector_store %arg4[%c0_5, %c0_6], %6 {strides = array<i32>} : memref<2x96xf32, #tpu.memory_space<vmem>>, vector<2x96xf32>,
    return
  }
  func.func @transform_0(%arg0: i32) -> (i32, i32) {
    %c0_i32 = arith.constant 0 : i32
    %c0_i32_0 = arith.constant 0 : i32
    return %arg0, %c0_i32 : i32, i32
  }
  func.func @transform_1(%arg0: i32) -> (i32, i32) {
    %c0_i32 = arith.constant 0 : i32
    %c0_i32_0 = arith.constant 0 : i32
    %c0_i32_1 = arith.constant 0 : i32
    return %c0_i32, %c0_i32_0 : i32, i32
  }
  func.func @transform_2(%arg0: i32) -> (i32, i32) {
    %c0_i32 = arith.constant 0 : i32
    %c0_i32_0 = arith.constant 0 : i32
    %c0_i32_1 = arith.constant 0 : i32
    return %c0_i32, %c0_i32_0 : i32, i32
  }
  func.func @transform_3(%arg0: i32) -> (i32, i32) {
    %c0_i32 = arith.constant 0 : i32
    %c0_i32_0 = arith.constant 0 : i32
    return %arg0, %c0_i32 : i32, i32
  }
}

module attributes {stable_mosaic.version = 11 : i64} {
  func.func @_fused_layers_kernel(%arg0: i32, %arg1: i32, %arg2: memref<1x16x32xf32, #tpu.memory_space<vmem>>, %arg3: memref<1x16x16xbf16, #tpu.memory_space<vmem>>, %arg4: memref<1x1x1x32xf32, #tpu.memory_space<vmem>>, %arg5: memref<3x32x64xbf16, #tpu.memory_space<vmem>>, %arg6: memref<1x16x64xbf16, #tpu.memory_space<vmem>>, %arg7: memref<1x32x64xbf16, #tpu.memory_space<vmem>>, %arg8: memref<1x1x64xf32, #tpu.memory_space<vmem>>, %arg9: memref<1x1x64xf32, #tpu.memory_space<vmem>>, %arg10: memref<1x16x32xf32, #tpu.memory_space<vmem>>, %arg11: memref<1x16x32xf32, #tpu.memory_space<vmem>>) attributes {dimension_semantics = [#tpu.dimension_semantics<parallel>, #tpu.dimension_semantics<arbitrary>], iteration_bounds = array<i64: 2, 3>, scalar_prefetch = 0 : i64, scratch_operands = 0 : i64, tpu.core_type = #tpu.core_type<tc>, window_params = [{transform_indices = @transform_0, window_bounds = array<i64: 1, 16, 32>}, {transform_indices = @transform_1, window_bounds = array<i64: 1, 16, 16>}, {transform_indices = @transform_2, window_bounds = array<i64: 1, 1, 1, 32>}, {transform_indices = @transform_3, window_bounds = array<i64: 3, 32, 64>}, {transform_indices = @transform_4, window_bounds = array<i64: 1, 16, 64>}, {transform_indices = @transform_5, window_bounds = array<i64: 1, 32, 64>}, {transform_indices = @transform_6, window_bounds = array<i64: 1, 1, 64>}, {transform_indices = @transform_7, window_bounds = array<i64: 1, 1, 64>}, {transform_indices = @transform_8, window_bounds = array<i64: 1, 16, 32>}, {transform_indices = @transform_9, window_bounds = array<i64: 1, 16, 32>}]} {
    %c0_i32 = arith.constant 0 : i32
    %0 = arith.cmpi eq, %arg1, %c0_i32 : i32
    %1 = arith.extui %0 : i1 to i32
    %c0_i32_0 = arith.constant 0 : i32
    %2 = arith.cmpi ne, %1, %c0_i32_0 : i32
    scf.if %2 {
      %c0_47 = arith.constant 0 : index
      %c0_48 = arith.constant 0 : index
      %c0_49 = arith.constant 0 : index
      %82 = vector.load %arg2[%c0_47, %c0_48, %c0_49] : memref<1x16x32xf32, #tpu.memory_space<vmem>>, vector<1x16x32xf32>
      %c0_50 = arith.constant 0 : index
      %c0_51 = arith.constant 0 : index
      %c0_52 = arith.constant 0 : index
      %83 = vector.load %arg10[%c0_50, %c0_51, %c0_52] : memref<1x16x32xf32, #tpu.memory_space<vmem>>, vector<1x16x32xf32>
      tpu.vector_store %arg10[%c0_50, %c0_51, %c0_52], %82 {strides = array<i32>} : memref<1x16x32xf32, #tpu.memory_space<vmem>>, vector<1x16x32xf32>,
      %cst_53 = arith.constant 0.000000e+00 : f32
      %84 = vector.broadcast %cst_53 : f32 to vector<1x16x32xf32>
      %c0_54 = arith.constant 0 : index
      %c0_55 = arith.constant 0 : index
      %c0_56 = arith.constant 0 : index
      %85 = vector.load %arg11[%c0_54, %c0_55, %c0_56] : memref<1x16x32xf32, #tpu.memory_space<vmem>>, vector<1x16x32xf32>
      tpu.vector_store %arg11[%c0_54, %c0_55, %c0_56], %84 {strides = array<i32>} : memref<1x16x32xf32, #tpu.memory_space<vmem>>, vector<1x16x32xf32>,
    } else {
    }
    %c0 = arith.constant 0 : index
    %c0_1 = arith.constant 0 : index
    %c0_2 = arith.constant 0 : index
    %3 = vector.load %arg10[%c0, %c0_1, %c0_2] : memref<1x16x32xf32, #tpu.memory_space<vmem>>, vector<1x16x32xf32>
    %4 = vector.shape_cast %3 : vector<1x16x32xf32> to vector<16x32xf32>
    %c0_3 = arith.constant 0 : index
    %c0_4 = arith.constant 0 : index
    %c0_5 = arith.constant 0 : index
    %c0_6 = arith.constant 0 : index
    %5 = vector.load %arg4[%c0_3, %c0_4, %c0_5, %c0_6] : memref<1x1x1x32xf32, #tpu.memory_space<vmem>>, vector<1x1x1x32xf32>
    %6 = vector.shape_cast %5 : vector<1x1x1x32xf32> to vector<1x32xf32>
    %7 = vector.broadcast %6 : vector<1x32xf32> to vector<16x32xf32>
    %8 = arith.addf %4, %7 : vector<16x32xf32>
    %9 = tpu.iota {dimensions = array<i32: 0>} : vector<16x1xi32>
    %cst = arith.constant 0.000000e+00 : f32
    %10 = vector.broadcast %cst : f32 to vector<1x32xf32>
    %c0_i32_7 = arith.constant 0 : i32
    %11 = vector.broadcast %c0_i32_7 : i32 to vector<16x1xi32>
    %12 = arith.cmpi eq, %9, %11 : vector<16x1xi32>
    %c1_i32 = arith.constant 1 : i32
    %13 = tpu.dynamic_rotate %8 by %c1_i32 dim 0 : vector<16x32xf32>, i32 -> vector<16x32xf32>
    %14 = vector.shape_cast %12 : vector<16x1xi1> to vector<16x1xi1>
    %15 = vector.broadcast %14 : vector<16x1xi1> to vector<16x32xi1>
    %16 = vector.shape_cast %10 : vector<1x32xf32> to vector<1x32xf32>
    %17 = vector.broadcast %16 : vector<1x32xf32> to vector<16x32xf32>
    %18 = arith.select %15, %17, %13 : vector<16x32xi1>, vector<16x32xf32>
    %c15_i32 = arith.constant 15 : i32
    %19 = vector.broadcast %c15_i32 : i32 to vector<16x1xi32>
    %20 = arith.cmpi eq, %9, %19 : vector<16x1xi32>
    %c15_i32_8 = arith.constant 15 : i32
    %21 = tpu.dynamic_rotate %8 by %c15_i32_8 dim 0 : vector<16x32xf32>, i32 -> vector<16x32xf32>
    %22 = vector.shape_cast %20 : vector<16x1xi1> to vector<16x1xi1>
    %23 = vector.broadcast %22 : vector<16x1xi1> to vector<16x32xi1>
    %24 = vector.shape_cast %10 : vector<1x32xf32> to vector<1x32xf32>
    %25 = vector.broadcast %24 : vector<1x32xf32> to vector<16x32xf32>
    %26 = arith.select %23, %25, %21 : vector<16x32xi1>, vector<16x32xf32>
    %27 = arith.truncf %18 : vector<16x32xf32> to vector<16x32xbf16>
    %c0_9 = arith.constant 0 : index
    %c0_10 = arith.constant 0 : index
    %c0_11 = arith.constant 0 : index
    %28 = vector.load %arg5[%c0_9, %c0_10, %c0_11] : memref<3x32x64xbf16, #tpu.memory_space<vmem>>, vector<1x32x64xbf16>
    %29 = vector.shape_cast %28 : vector<1x32x64xbf16> to vector<32x64xbf16>
    %cst_12 = arith.constant dense<0.000000e+00> : vector<16x64xf32>
    %30 = tpu.matmul %27, %29, %cst_12 {dimension_numbers = #tpu.dot_dimension_numbers<[1], [0], [0], [1], [0, 0, 1, 1], [], []>} : vector<16x32xbf16>, vector<32x64xbf16>, vector<16x64xf32> -> vector<16x64xf32>
    %31 = arith.truncf %8 : vector<16x32xf32> to vector<16x32xbf16>
    %c1 = arith.constant 1 : index
    %c0_13 = arith.constant 0 : index
    %c0_14 = arith.constant 0 : index
    %32 = vector.load %arg5[%c1, %c0_13, %c0_14] : memref<3x32x64xbf16, #tpu.memory_space<vmem>>, vector<1x32x64xbf16>
    %33 = vector.shape_cast %32 : vector<1x32x64xbf16> to vector<32x64xbf16>
    %cst_15 = arith.constant dense<0.000000e+00> : vector<16x64xf32>
    %34 = tpu.matmul %31, %33, %cst_15 {dimension_numbers = #tpu.dot_dimension_numbers<[1], [0], [0], [1], [0, 0, 1, 1], [], []>} : vector<16x32xbf16>, vector<32x64xbf16>, vector<16x64xf32> -> vector<16x64xf32>
    %35 = arith.addf %30, %34 : vector<16x64xf32>
    %36 = arith.truncf %26 : vector<16x32xf32> to vector<16x32xbf16>
    %c2 = arith.constant 2 : index
    %c0_16 = arith.constant 0 : index
    %c0_17 = arith.constant 0 : index
    %37 = vector.load %arg5[%c2, %c0_16, %c0_17] : memref<3x32x64xbf16, #tpu.memory_space<vmem>>, vector<1x32x64xbf16>
    %38 = vector.shape_cast %37 : vector<1x32x64xbf16> to vector<32x64xbf16>
    %cst_18 = arith.constant dense<0.000000e+00> : vector<16x64xf32>
    %39 = tpu.matmul %36, %38, %cst_18 {dimension_numbers = #tpu.dot_dimension_numbers<[1], [0], [0], [1], [0, 0, 1, 1], [], []>} : vector<16x32xbf16>, vector<32x64xbf16>, vector<16x64xf32> -> vector<16x64xf32>
    %40 = arith.addf %35, %39 : vector<16x64xf32>
    %c0_19 = arith.constant 0 : index
    %c0_20 = arith.constant 0 : index
    %c0_21 = arith.constant 0 : index
    %41 = vector.load %arg3[%c0_19, %c0_20, %c0_21] : memref<1x16x16xbf16, #tpu.memory_space<vmem>>, vector<1x16x16xbf16>
    %42 = vector.shape_cast %41 : vector<1x16x16xbf16> to vector<16x16xbf16>
    %c0_22 = arith.constant 0 : index
    %c0_23 = arith.constant 0 : index
    %c0_24 = arith.constant 0 : index
    %43 = vector.load %arg6[%c0_22, %c0_23, %c0_24] : memref<1x16x64xbf16, #tpu.memory_space<vmem>>, vector<1x16x64xbf16>
    %44 = vector.shape_cast %43 : vector<1x16x64xbf16> to vector<16x64xbf16>
    %cst_25 = arith.constant dense<0.000000e+00> : vector<16x64xf32>
    %45 = tpu.matmul %42, %44, %cst_25 {dimension_numbers = #tpu.dot_dimension_numbers<[1], [0], [0], [1], [0, 0, 1, 1], [], []>} : vector<16x16xbf16>, vector<16x64xbf16>, vector<16x64xf32> -> vector<16x64xf32>
    %46 = arith.addf %40, %45 : vector<16x64xf32>
    %c0_26 = arith.constant 0 : index
    %c0_27 = arith.constant 0 : index
    %c0_28 = arith.constant 0 : index
    %47 = vector.load %arg8[%c0_26, %c0_27, %c0_28] : memref<1x1x64xf32, #tpu.memory_space<vmem>>, vector<1x1x64xf32>
    %48 = vector.shape_cast %47 : vector<1x1x64xf32> to vector<1x64xf32>
    %49 = vector.broadcast %48 : vector<1x64xf32> to vector<16x64xf32>
    %50 = arith.addf %46, %49 : vector<16x64xf32>
    %51 = vector.extract_strided_slice %50 {offsets = [0, 0], sizes = [16, 32], strides = [1, 1]} : vector<16x64xf32> to vector<16x32xf32>
    %52 = arith.negf %51 : vector<16x32xf32>
    %53 = math.exp %52 : vector<16x32xf32>
    %cst_29 = arith.constant 1.000000e+00 : f32
    %54 = vector.broadcast %cst_29 : f32 to vector<16x32xf32>
    %55 = arith.addf %54, %53 : vector<16x32xf32>
    %56 = arith.divf %54, %55 : vector<16x32xf32>
    %57 = vector.extract_strided_slice %50 {offsets = [0, 32], sizes = [16, 32], strides = [1, 1]} : vector<16x64xf32> to vector<16x32xf32>
    %58 = math.tanh %57 : vector<16x32xf32>
    %59 = arith.mulf %56, %58 : vector<16x32xf32>
    %60 = arith.truncf %59 : vector<16x32xf32> to vector<16x32xbf16>
    %c0_30 = arith.constant 0 : index
    %c0_31 = arith.constant 0 : index
    %c0_32 = arith.constant 0 : index
    %61 = vector.load %arg7[%c0_30, %c0_31, %c0_32] : memref<1x32x64xbf16, #tpu.memory_space<vmem>>, vector<1x32x64xbf16>
    %62 = vector.shape_cast %61 : vector<1x32x64xbf16> to vector<32x64xbf16>
    %cst_33 = arith.constant dense<0.000000e+00> : vector<16x64xf32>
    %63 = tpu.matmul %60, %62, %cst_33 {dimension_numbers = #tpu.dot_dimension_numbers<[1], [0], [0], [1], [0, 0, 1, 1], [], []>} : vector<16x32xbf16>, vector<32x64xbf16>, vector<16x64xf32> -> vector<16x64xf32>
    %c0_34 = arith.constant 0 : index
    %c0_35 = arith.constant 0 : index
    %c0_36 = arith.constant 0 : index
    %64 = vector.load %arg9[%c0_34, %c0_35, %c0_36] : memref<1x1x64xf32, #tpu.memory_space<vmem>>, vector<1x1x64xf32>
    %65 = vector.shape_cast %64 : vector<1x1x64xf32> to vector<1x64xf32>
    %66 = vector.broadcast %65 : vector<1x64xf32> to vector<16x64xf32>
    %67 = arith.addf %63, %66 : vector<16x64xf32>
    %68 = vector.extract_strided_slice %67 {offsets = [0, 0], sizes = [16, 32], strides = [1, 1]} : vector<16x64xf32> to vector<16x32xf32>
    %69 = arith.addf %4, %68 : vector<16x32xf32>
    %cst_37 = arith.constant 0.707106769 : f32
    %70 = vector.broadcast %cst_37 : f32 to vector<16x32xf32>
    %71 = arith.mulf %69, %70 : vector<16x32xf32>
    %c0_38 = arith.constant 0 : index
    %c0_39 = arith.constant 0 : index
    %c0_40 = arith.constant 0 : index
    %72 = vector.load %arg10[%c0_38, %c0_39, %c0_40] : memref<1x16x32xf32, #tpu.memory_space<vmem>>, vector<1x16x32xf32>
    %73 = vector.shape_cast %72 : vector<1x16x32xf32> to vector<16x32xf32>
    %74 = vector.shape_cast %71 : vector<16x32xf32> to vector<1x16x32xf32>
    tpu.vector_store %arg10[%c0_38, %c0_39, %c0_40], %74 {strides = array<i32>} : memref<1x16x32xf32, #tpu.memory_space<vmem>>, vector<1x16x32xf32>,
    %c0_41 = arith.constant 0 : index
    %c0_42 = arith.constant 0 : index
    %c0_43 = arith.constant 0 : index
    %75 = vector.load %arg11[%c0_41, %c0_42, %c0_43] : memref<1x16x32xf32, #tpu.memory_space<vmem>>, vector<1x16x32xf32>
    %76 = vector.shape_cast %75 : vector<1x16x32xf32> to vector<16x32xf32>
    %77 = vector.extract_strided_slice %67 {offsets = [0, 32], sizes = [16, 32], strides = [1, 1]} : vector<16x64xf32> to vector<16x32xf32>
    %78 = arith.addf %76, %77 : vector<16x32xf32>
    %c0_44 = arith.constant 0 : index
    %c0_45 = arith.constant 0 : index
    %c0_46 = arith.constant 0 : index
    %79 = vector.load %arg11[%c0_44, %c0_45, %c0_46] : memref<1x16x32xf32, #tpu.memory_space<vmem>>, vector<1x16x32xf32>
    %80 = vector.shape_cast %79 : vector<1x16x32xf32> to vector<16x32xf32>
    %81 = vector.shape_cast %78 : vector<16x32xf32> to vector<1x16x32xf32>
    tpu.vector_store %arg11[%c0_44, %c0_45, %c0_46], %81 {strides = array<i32>} : memref<1x16x32xf32, #tpu.memory_space<vmem>>, vector<1x16x32xf32>,
    return
  }
  func.func @transform_0(%arg0: i32, %arg1: i32) -> (i32, i32, i32) {
    %c0_i32 = arith.constant 0 : i32
    %c0_i32_0 = arith.constant 0 : i32
    %c0_i32_1 = arith.constant 0 : i32
    return %arg0, %c0_i32, %c0_i32_0 : i32, i32, i32
  }
  func.func @transform_1(%arg0: i32, %arg1: i32) -> (i32, i32, i32) {
    %c0_i32 = arith.constant 0 : i32
    %c0_i32_0 = arith.constant 0 : i32
    %c0_i32_1 = arith.constant 0 : i32
    return %arg0, %c0_i32, %c0_i32_0 : i32, i32, i32
  }
  func.func @transform_2(%arg0: i32, %arg1: i32) -> (i32, i32, i32, i32) {
    %c0_i32 = arith.constant 0 : i32
    %c0_i32_0 = arith.constant 0 : i32
    %c0_i32_1 = arith.constant 0 : i32
    return %arg0, %arg1, %c0_i32, %c0_i32_0 : i32, i32, i32, i32
  }
  func.func @transform_3(%arg0: i32, %arg1: i32) -> (i32, i32, i32) {
    %c0_i32 = arith.constant 0 : i32
    %c0_i32_0 = arith.constant 0 : i32
    %c0_i32_1 = arith.constant 0 : i32
    return %arg1, %c0_i32, %c0_i32_0 : i32, i32, i32
  }
  func.func @transform_4(%arg0: i32, %arg1: i32) -> (i32, i32, i32) {
    %c0_i32 = arith.constant 0 : i32
    %c0_i32_0 = arith.constant 0 : i32
    %c0_i32_1 = arith.constant 0 : i32
    return %arg1, %c0_i32, %c0_i32_0 : i32, i32, i32
  }
  func.func @transform_5(%arg0: i32, %arg1: i32) -> (i32, i32, i32) {
    %c0_i32 = arith.constant 0 : i32
    %c0_i32_0 = arith.constant 0 : i32
    %c0_i32_1 = arith.constant 0 : i32
    return %arg1, %c0_i32, %c0_i32_0 : i32, i32, i32
  }
  func.func @transform_6(%arg0: i32, %arg1: i32) -> (i32, i32, i32) {
    %c0_i32 = arith.constant 0 : i32
    %c0_i32_0 = arith.constant 0 : i32
    %c0_i32_1 = arith.constant 0 : i32
    return %arg1, %c0_i32, %c0_i32_0 : i32, i32, i32
  }
  func.func @transform_7(%arg0: i32, %arg1: i32) -> (i32, i32, i32) {
    %c0_i32 = arith.constant 0 : i32
    %c0_i32_0 = arith.constant 0 : i32
    %c0_i32_1 = arith.constant 0 : i32
    return %arg1, %c0_i32, %c0_i32_0 : i32, i32, i32
  }
  func.func @transform_8(%arg0: i32, %arg1: i32) -> (i32, i32, i32) {
    %c0_i32 = arith.constant 0 : i32
    %c0_i32_0 = arith.constant 0 : i32
    %c0_i32_1 = arith.constant 0 : i32
    return %arg0, %c0_i32, %c0_i32_0 : i32, i32, i32
  }
  func.func @transform_9(%arg0: i32, %arg1: i32) -> (i32, i32, i32) {
    %c0_i32 = arith.constant 0 : i32
    %c0_i32_0 = arith.constant 0 : i32
    %c0_i32_1 = arith.constant 0 : i32
    return %arg0, %c0_i32, %c0_i32_0 : i32, i32, i32
  }
}

module attributes {stable_mosaic.version = 11 : i64} {
  func.func @_skip_out_kernel(%arg0: i32, %arg1: memref<32x32xf32, #tpu.memory_space<vmem>>, %arg2: memref<32x32xbf16, #tpu.memory_space<vmem>>, %arg3: memref<1x32xf32, #tpu.memory_space<vmem>>, %arg4: memref<32x128xbf16, #tpu.memory_space<vmem>>, %arg5: memref<1x128xf32, #tpu.memory_space<vmem>>, %arg6: memref<32x32xf32, #tpu.memory_space<vmem>>, %arg7: memref<32x128xf32, #tpu.memory_space<vmem>>) attributes {dimension_semantics = [#tpu.dimension_semantics<parallel>], iteration_bounds = array<i64: 1>, scalar_prefetch = 0 : i64, scratch_operands = 0 : i64, tpu.core_type = #tpu.core_type<tc>, window_params = [{transform_indices = @transform_0, window_bounds = array<i64: 32, 32>}, {pipeline_mode = #tpu.pipeline_mode<synchronous>, transform_indices = @transform_1, window_bounds = array<i64: 32, 32>}, {pipeline_mode = #tpu.pipeline_mode<synchronous>, transform_indices = @transform_2, window_bounds = array<i64: 1, 32>}, {pipeline_mode = #tpu.pipeline_mode<synchronous>, transform_indices = @transform_3, window_bounds = array<i64: 32, 128>}, {pipeline_mode = #tpu.pipeline_mode<synchronous>, transform_indices = @transform_4, window_bounds = array<i64: 1, 128>}, {transform_indices = @transform_5, window_bounds = array<i64: 32, 32>}, {transform_indices = @transform_6, window_bounds = array<i64: 32, 128>}]} {
    %c0 = arith.constant 0 : index
    %c0_0 = arith.constant 0 : index
    %0 = vector.load %arg1[%c0, %c0_0] : memref<32x32xf32, #tpu.memory_space<vmem>>, vector<32x32xf32>
    %1 = arith.truncf %0 : vector<32x32xf32> to vector<32x32xbf16>
    %c0_1 = arith.constant 0 : index
    %c0_2 = arith.constant 0 : index
    %2 = vector.load %arg2[%c0_1, %c0_2] : memref<32x32xbf16, #tpu.memory_space<vmem>>, vector<32x32xbf16>
    %cst = arith.constant dense<0.000000e+00> : vector<32x32xf32>
    %3 = tpu.matmul %1, %2, %cst {dimension_numbers = #tpu.dot_dimension_numbers<[1], [0], [0], [1], [0, 0, 1, 1], [], []>} : vector<32x32xbf16>, vector<32x32xbf16>, vector<32x32xf32> -> vector<32x32xf32>
    %c0_3 = arith.constant 0 : index
    %c0_4 = arith.constant 0 : index
    %4 = vector.load %arg3[%c0_3, %c0_4] : memref<1x32xf32, #tpu.memory_space<vmem>>, vector<1x32xf32>
    %5 = vector.broadcast %4 : vector<1x32xf32> to vector<32x32xf32>
    %6 = arith.addf %3, %5 : vector<32x32xf32>
    %cst_5 = arith.constant 0.000000e+00 : f32
    %7 = vector.broadcast %cst_5 : f32 to vector<32x32xf32>
    %8 = arith.maximumf %6, %7 : vector<32x32xf32>
    %c0_6 = arith.constant 0 : index
    %c0_7 = arith.constant 0 : index
    %9 = vector.load %arg6[%c0_6, %c0_7] : memref<32x32xf32, #tpu.memory_space<vmem>>, vector<32x32xf32>
    tpu.vector_store %arg6[%c0_6, %c0_7], %8 {strides = array<i32>} : memref<32x32xf32, #tpu.memory_space<vmem>>, vector<32x32xf32>,
    %10 = arith.truncf %8 : vector<32x32xf32> to vector<32x32xbf16>
    %c0_8 = arith.constant 0 : index
    %c0_9 = arith.constant 0 : index
    %11 = vector.load %arg4[%c0_8, %c0_9] : memref<32x128xbf16, #tpu.memory_space<vmem>>, vector<32x128xbf16>
    %cst_10 = arith.constant dense<0.000000e+00> : vector<32x128xf32>
    %12 = tpu.matmul %10, %11, %cst_10 {dimension_numbers = #tpu.dot_dimension_numbers<[1], [0], [0], [1], [0, 0, 1, 1], [], []>} : vector<32x32xbf16>, vector<32x128xbf16>, vector<32x128xf32> -> vector<32x128xf32>
    %c0_11 = arith.constant 0 : index
    %c0_12 = arith.constant 0 : index
    %13 = vector.load %arg5[%c0_11, %c0_12] : memref<1x128xf32, #tpu.memory_space<vmem>>, vector<1x128xf32>
    %14 = vector.broadcast %13 : vector<1x128xf32> to vector<32x128xf32>
    %15 = arith.addf %12, %14 : vector<32x128xf32>
    %c0_13 = arith.constant 0 : index
    %c0_14 = arith.constant 0 : index
    %16 = vector.load %arg7[%c0_13, %c0_14] : memref<32x128xf32, #tpu.memory_space<vmem>>, vector<32x128xf32>
    tpu.vector_store %arg7[%c0_13, %c0_14], %15 {strides = array<i32>} : memref<32x128xf32, #tpu.memory_space<vmem>>, vector<32x128xf32>,
    return
  }
  func.func @transform_0(%arg0: i32) -> (i32, i32) {
    %c0_i32 = arith.constant 0 : i32
    %c0_i32_0 = arith.constant 0 : i32
    return %arg0, %c0_i32 : i32, i32
  }
  func.func @transform_1(%arg0: i32) -> (i32, i32) {
    %c0_i32 = arith.constant 0 : i32
    %c0_i32_0 = arith.constant 0 : i32
    %c0_i32_1 = arith.constant 0 : i32
    return %c0_i32, %c0_i32_0 : i32, i32
  }
  func.func @transform_2(%arg0: i32) -> (i32, i32) {
    %c0_i32 = arith.constant 0 : i32
    %c0_i32_0 = arith.constant 0 : i32
    %c0_i32_1 = arith.constant 0 : i32
    return %c0_i32, %c0_i32_0 : i32, i32
  }
  func.func @transform_3(%arg0: i32) -> (i32, i32) {
    %c0_i32 = arith.constant 0 : i32
    %c0_i32_0 = arith.constant 0 : i32
    %c0_i32_1 = arith.constant 0 : i32
    return %c0_i32, %c0_i32_0 : i32, i32
  }
  func.func @transform_4(%arg0: i32) -> (i32, i32) {
    %c0_i32 = arith.constant 0 : i32
    %c0_i32_0 = arith.constant 0 : i32
    %c0_i32_1 = arith.constant 0 : i32
    return %c0_i32, %c0_i32_0 : i32, i32
  }
  func.func @transform_5(%arg0: i32) -> (i32, i32) {
    %c0_i32 = arith.constant 0 : i32
    %c0_i32_0 = arith.constant 0 : i32
    return %arg0, %c0_i32 : i32, i32
  }
  func.func @transform_6(%arg0: i32) -> (i32, i32) {
    %c0_i32 = arith.constant 0 : i32
    %c0_i32_0 = arith.constant 0 : i32
    return %arg0, %c0_i32 : i32, i32
  }
}

</mosaic_0001>

<llo_original>
// kernel: wavenet_forward.6
$region0: #{wavenet_forward.6}
  #allocation0 [shape = 'u32[]', space=smem, size = 0x4, offset = 0x4, fixed_abs, tag = 'smem constant byte address 0x4 - core index']
  #allocation1 [shape = 'u32[144,128]{1,0:T(1,128)}', space=vmem, size = 0x12000, scoped, tag = 'internal scratch']
  %s0 = inlined_call_operand.vmem [shape: f32[32,8], index: 0, kind: input, shape index: {}]
  %s1 = inlined_call_operand.vmem [shape: bf16[8,32], index: 1, kind: input, shape index: {}]
  %s2 = inlined_call_operand.vmem [shape: f32[1,32], index: 2, kind: input, shape index: {}]
  %s3 = inlined_call_operand.vmem [shape: f32[32,32], index: 3, kind: output, shape index: {}]
  %s4 = sld [smem:[#allocation0]]
  $region22: #{wavenet_forward.6} parent=0
    _
  %s6 = ssub.s32 1, %s4
  %s7 = scalar_select 0, %s6, %s4
  // Predicated region
  $region2: #{wavenet_forward.6} parent=0 // pred_check
    _
  $region3: #{wavenet_forward.6} parent=0 // pred_check_branch
    %9 = sbr.rel (0) target = $region5
  $region4: #{wavenet_forward.6} parent=0 // pred_region
    _
  $region5: #{wavenet_forward.6} parent=0 // pred_fallthru
    _
  // Predicated region
  $region6: #{wavenet_forward.6} parent=0 // pred_check
    _
  $region7: #{wavenet_forward.6} parent=0 // pred_check_branch
    %11 = sbr.rel (0) target = $region9
  $region8: #{wavenet_forward.6} parent=0 // pred_region
    _
  $region9: #{wavenet_forward.6} parent=0 // pred_fallthru
    _
  // Predicated region
  $region10: #{wavenet_forward.6} parent=0 // pred_check
    _
  $region11: #{wavenet_forward.6} parent=0 // pred_check_branch
    %13 = sbr.rel (0) target = $region13
  $region12: #{wavenet_forward.6} parent=0 // pred_region
    _
  $region13: #{wavenet_forward.6} parent=0 // pred_fallthru
    _
  %v15 = vld [vmem:[%s0] sm:$0xff]
  %v16 = vld [vmem:[%s0 + $0x8] sm:$0xff]
  %v17 = vld [vmem:[%s0 + $0x10] sm:$0xff]
  %v18 = vld [vmem:[%s0 + $0x18] sm:$0xff]
  %v19 = vpack.c.bf16 %v16, %v15
  %v20 = vpack.c.bf16 %v18, %v17
  %v21 = vld [vmem:[%s1] sm:$0xf]
  %v22 = vld [vmem:[%s2] sm:$0x1]
  %v24 = vlaneseq
  %v25 = vshrl.u32 %v24, 7
  %v26 = vsub.s32 0, %v25
  %v27 = vrot.slane %v22, %v26
  %vm29 = vcmask 64512
  %v31 = vsel %vm29, %v19, 0
  %v34 = vsel %vm29, %v20, 0
  %vm36 = vcmask 1043456
  %v38 = vsel %vm36, %v21, 0
  %40 = vmatprep.subr.bf16.mxu0 0
  %41 = vmatpush1.bf16.msra.mxu0 %v38
  %42 = vmatprep.subr.bf16.mxu0 0
  %43 = vmatpush1.bf16.msra.mxu0 0
  %44 = vmatprep.subr.bf16.mxu0 0
  %45 = vmatpush1.bf16.msra.mxu0 0
  %46 = vmatprep.subr.bf16.mxu0 0
  %47 = vmatpush1.bf16.msra.mxu0 0
  %48 = vmatprep.subr.bf16.mxu0 0
  %49 = vmatpush1.bf16.msra.mxu0 0
  %50 = vmatprep.subr.bf16.mxu0 0
  %51 = vmatpush1.bf16.msra.mxu0 0
  %52 = vmatprep.subr.bf16.mxu0 0
  %53 = vmatpush1.bf16.msra.mxu0 0
  %54 = vmatprep.subr.bf16.mxu0 0
  %55 = vmatpush1.bf16.msra.mxu0 0
  %56 = vmatprep.subr.bf16.mxu0 0
  %57 = vmatpush1.bf16.msra.mxu0 0
  %58 = vmatprep.subr.bf16.mxu0 0
  %59 = vmatpush1.bf16.msra.mxu0 0
  %60 = vmatprep.subr.bf16.mxu0 0
  %61 = vmatpush1.bf16.msra.mxu0 0
  %62 = vmatprep.subr.bf16.mxu0 0
  %63 = vmatpush1.bf16.msra.mxu0 0
  %64 = vmatprep.subr.bf16.mxu0 0
  %65 = vmatpush1.bf16.msra.mxu0 0
  %66 = vmatprep.subr.bf16.mxu0 0
  %67 = vmatpush1.bf16.msra.mxu0 0
  %68 = vmatprep.subr.bf16.mxu0 0
  %69 = vmatpush1.bf16.msra.mxu0 0
  %70 = vmatprep.subr.bf16.mxu0 0
  %71 = vmatpush1.bf16.msra.mxu0 0
  %72 = vmatprep.mubr.bf16.mxu0 0
  %73 = vmatmul.mubr.bf16.gmra.mrb[0].mxu0 %v31
  %v74 = vpop.f32.mrb[0].mxu0
  %v75 = vadd.f32 %v27, %v74
  %v76 = vpop.f32.mrb[0].mxu0
  %v77 = vpop.f32.mrb[0].mxu0
  %v78 = vadd.f32 %v27, %v77
  %v79 = vpop.f32.mrb[0].mxu0
  %80 = vmatprep.mubr.bf16.mxu0 0
  %81 = vmatmul.mubr.bf16.gmra.mrb[0].mxu0 %v34
  %v82 = vpop.f32.mrb[0].mxu0
  %v83 = vadd.f32 %v27, %v82
  %v84 = vpop.f32.mrb[0].mxu0
  %v85 = vpop.f32.mrb[0].mxu0
  %v86 = vadd.f32 %v27, %v85
  %v87 = vpop.f32.mrb[0].mxu0
  %88 = vdwg.mxu0
  %v89 = vmax.f32 %v75, 0.0
  %v90 = vmax.f32 %v78, 0.0
  %v91 = vmax.f32 %v83, 0.0
  %v92 = vmax.f32 %v86, 0.0
  %vm93 = vcmask 261120
  %94 = vst.msk [vmem:[%s3] sm:$0xff] %vm93, %v89
  %95 = vst.msk [vmem:[%s3 + $0x8] sm:$0xff] %vm93, %v90
  %96 = vst.msk [vmem:[%s3 + $0x10] sm:$0xff] %vm93, %v91
  %97 = vst.msk [vmem:[%s3 + $0x18] sm:$0xff] %vm93, %v92
  // Predicated region
  $region14: #{wavenet_forward.6} parent=0 // pred_check
    _
  $region15: #{wavenet_forward.6} parent=0 // pred_check_branch
    %99 = sbr.rel (0) target = $region17
  $region16: #{wavenet_forward.6} parent=0 // pred_region
    _
  $region17: #{wavenet_forward.6} parent=0 // pred_fallthru
    _
  // Predicated region
  $region18: #{wavenet_forward.6} parent=0 // pred_check
    _
  $region19: #{wavenet_forward.6} parent=0 // pred_check_branch
    %101 = sbr.rel (0) target = $region21
  $region20: #{wavenet_forward.6} parent=0 // pred_region
    _
  $region21: #{wavenet_forward.6} parent=0 // pred_fallthru
    _

// kernel: wavenet_forward.7
$region0: #{wavenet_forward.7}
  #allocation0 [shape = 'u32[]', space=smem, size = 0x4, offset = 0x4, fixed_abs, tag = 'smem constant byte address 0x4 - core index']
  #allocation1 [shape = 'u32[144,128]{1,0:T(1,128)}', space=vmem, size = 0x12000, scoped, tag = 'internal scratch']
  %s0 = inlined_call_operand.vmem [shape: f32[2,32], index: 0, kind: input, shape index: {}]
  %s1 = inlined_call_operand.vmem [shape: bf16[32,128], index: 1, kind: input, shape index: {}]
  %s2 = inlined_call_operand.vmem [shape: f32[1,128], index: 2, kind: input, shape index: {}]
  %s3 = inlined_call_operand.vmem [shape: f32[2,128], index: 3, kind: output, shape index: {}]
  %s4 = sld [smem:[#allocation0]]
  $region22: #{wavenet_forward.7} parent=0
    _
  %s6 = ssub.s32 1, %s4
  %s7 = scalar_select 0, %s6, %s4
  // Predicated region
  $region2: #{wavenet_forward.7} parent=0 // pred_check
    _
  $region3: #{wavenet_forward.7} parent=0 // pred_check_branch
    %9 = sbr.rel (0) target = $region5
  $region4: #{wavenet_forward.7} parent=0 // pred_region
    _
  $region5: #{wavenet_forward.7} parent=0 // pred_fallthru
    _
  // Predicated region
  $region6: #{wavenet_forward.7} parent=0 // pred_check
    _
  $region7: #{wavenet_forward.7} parent=0 // pred_check_branch
    %11 = sbr.rel (0) target = $region9
  $region8: #{wavenet_forward.7} parent=0 // pred_region
    _
  $region9: #{wavenet_forward.7} parent=0 // pred_fallthru
    _
  // Predicated region
  $region10: #{wavenet_forward.7} parent=0 // pred_check
    _
  $region11: #{wavenet_forward.7} parent=0 // pred_check_branch
    %13 = sbr.rel (0) target = $region13
  $region12: #{wavenet_forward.7} parent=0 // pred_region
    _
  $region13: #{wavenet_forward.7} parent=0 // pred_fallthru
    _
  %v15 = vld [vmem:[%s0] sm:$0x3]
  %v16 = vpack.c.bf16 %v15, %v15
  %v17 = vld [vmem:[%s1] sm:$0xf]
  %v18 = vld [vmem:[%s1 + $0x4] sm:$0xf]
  %v19 = vld [vmem:[%s1 + $0x8] sm:$0xf]
  %v20 = vld [vmem:[%s1 + $0xc] sm:$0xf]
  %v21 = vld [vmem:[%s2] sm:$0x1]
  %v23 = vlaneseq
  %v24 = vshrl.u32 %v23, 7
  %v25 = vsub.s32 0, %v24
  %v26 = vrot.slane %v21, %v25
  %v32 = vunpack.c.l.b16 %v17
  %v33 = vunpack.c.l.b16 %v18
  %v34 = vunpack.c.l.b16 %v19
  %v35 = vunpack.c.l.b16 %v20
  %v36 = vpack.c.b16 %v33, %v32
  %v37 = vpack.c.b16 %v35, %v34
  %vm40 = vcmask 261120
  %v42 = vsel %vm40, %v16, 0
  %44 = vmatprep.subr.bf16.mxu0 0
  %45 = vmatpush1.bf16.msra.mxu0 %v36
  %46 = vmatprep.subr.bf16.mxu0 0
  %47 = vmatpush1.bf16.msra.mxu0 %v37
  %48 = vmatprep.subr.bf16.mxu0 0
  %49 = vmatpush1.bf16.msra.mxu0 0
  %50 = vmatprep.subr.bf16.mxu0 0
  %51 = vmatpush1.bf16.msra.mxu0 0
  %52 = vmatprep.subr.bf16.mxu0 0
  %53 = vmatpush1.bf16.msra.mxu0 0
  %54 = vmatprep.subr.bf16.mxu0 0
  %55 = vmatpush1.bf16.msra.mxu0 0
  %56 = vmatprep.subr.bf16.mxu0 0
  %57 = vmatpush1.bf16.msra.mxu0 0
  %58 = vmatprep.subr.bf16.mxu0 0
  %59 = vmatpush1.bf16.msra.mxu0 0
  %60 = vmatprep.subr.bf16.mxu0 0
  %61 = vmatpush1.bf16.msra.mxu0 0
  %62 = vmatprep.subr.bf16.mxu0 0
  %63 = vmatpush1.bf16.msra.mxu0 0
  %64 = vmatprep.subr.bf16.mxu0 0
  %65 = vmatpush1.bf16.msra.mxu0 0
  %66 = vmatprep.subr.bf16.mxu0 0
  %67 = vmatpush1.bf16.msra.mxu0 0
  %68 = vmatprep.subr.bf16.mxu0 0
  %69 = vmatpush1.bf16.msra.mxu0 0
  %70 = vmatprep.subr.bf16.mxu0 0
  %71 = vmatpush1.bf16.msra.mxu0 0
  %72 = vmatprep.subr.bf16.mxu0 0
  %73 = vmatpush1.bf16.msra.mxu0 0
  %74 = vmatprep.subr.bf16.mxu0 0
  %75 = vmatpush1.bf16.msra.mxu0 0
  %76 = vmatprep.mubr.bf16.mxu0 0
  %77 = vmatmul.mubr.bf16.gmra.mrb[0].mxu0 %v42
  %v78 = vpop.f32.mrb[0].mxu0
  %v79 = vadd.f32 %v26, %v78
  %v80 = vpop.f32.mrb[0].mxu0
  %v81 = vpop.f32.mrb[0].mxu0
  %v82 = vpop.f32.mrb[0].mxu0
  %83 = vdwg.mxu0
  %v84 = vmax.f32 %v79, 0.0
  %vm85 = vcmp.ne.f32.partialorder %v79, %v79
  %v86 = vadd.f32 %v79, 0.0
  %v87 = vand.u32 2147483647, %v79
  %v88 = vsub.f32 0.0, %v87
  %v89 = vmul.f32 %v88, 1.442695
  %v90 = vpow.pop %v89
  %v91 = vadd.f32 %v90, 1.0
  %v92 = vlog2.pop %v91
  %v93 = vmul.f32 %v92, 0.6931472
  %v94 = vmul.f32 -0.5, %v90
  %v95 = vadd.f32 %v94, 1.0
  %v96 = vmul.f32 %v95, %v90
  %v97 = vand.u32 2147483647, %v90
  %vm98 = vcmp.lt.f32.partialorder %v97, 0.0004427343
  %v99 = vsel %vm98, %v96, %v93
  %v100 = vadd.f32 %v84, %v99
  %v101 = vsel %vm85, %v86, %v100
  %v102 = vtanh.pop %v101
  %v103 = vmul.f32 %v79, %v102
  %104 = vst [vmem:[%s3] sm:$0x3] %v103
  // Predicated region
  $region14: #{wavenet_forward.7} parent=0 // pred_check
    _
  $region15: #{wavenet_forward.7} parent=0 // pred_check_branch
    %106 = sbr.rel (0) target = $region17
  $region16: #{wavenet_forward.7} parent=0 // pred_region
    _
  $region17: #{wavenet_forward.7} parent=0 // pred_fallthru
    _
  // Predicated region
  $region18: #{wavenet_forward.7} parent=0 // pred_check
    _
  $region19: #{wavenet_forward.7} parent=0 // pred_check_branch
    %108 = sbr.rel (0) target = $region21
  $region20: #{wavenet_forward.7} parent=0 // pred_region
    _
  $region21: #{wavenet_forward.7} parent=0 // pred_fallthru
    _

// kernel: wavenet_forward.8
$region0: #{wavenet_forward.8}
  #allocation0 [shape = 'u32[]', space=smem, size = 0x4, offset = 0x4, fixed_abs, tag = 'smem constant byte address 0x4 - core index']
  #allocation1 [shape = 'u32[144,128]{1,0:T(1,128)}', space=vmem, size = 0x12000, scoped, tag = 'internal scratch']
  %s0 = inlined_call_operand.vmem [shape: f32[2,128], index: 0, kind: input, shape index: {}]
  %s1 = inlined_call_operand.vmem [shape: bf16[128,32], index: 1, kind: input, shape index: {}]
  %s2 = inlined_call_operand.vmem [shape: f32[1,32], index: 2, kind: input, shape index: {}]
  %s3 = inlined_call_operand.vmem [shape: f32[2,32], index: 3, kind: output, shape index: {}]
  %s4 = sld [smem:[#allocation0]]
  $region22: #{wavenet_forward.8} parent=0
    _
  %s6 = ssub.s32 1, %s4
  %s7 = scalar_select 0, %s6, %s4
  // Predicated region
  $region2: #{wavenet_forward.8} parent=0 // pred_check
    _
  $region3: #{wavenet_forward.8} parent=0 // pred_check_branch
    %9 = sbr.rel (0) target = $region5
  $region4: #{wavenet_forward.8} parent=0 // pred_region
    _
  $region5: #{wavenet_forward.8} parent=0 // pred_fallthru
    _
  // Predicated region
  $region6: #{wavenet_forward.8} parent=0 // pred_check
    _
  $region7: #{wavenet_forward.8} parent=0 // pred_check_branch
    %11 = sbr.rel (0) target = $region9
  $region8: #{wavenet_forward.8} parent=0 // pred_region
    _
  $region9: #{wavenet_forward.8} parent=0 // pred_fallthru
    _
  // Predicated region
  $region10: #{wavenet_forward.8} parent=0 // pred_check
    _
  $region11: #{wavenet_forward.8} parent=0 // pred_check_branch
    %13 = sbr.rel (0) target = $region13
  $region12: #{wavenet_forward.8} parent=0 // pred_region
    _
  $region13: #{wavenet_forward.8} parent=0 // pred_fallthru
    _
  %v15 = vld [vmem:[%s0] sm:$0x3]
  %v16 = vpack.c.bf16 %v15, %v15
  %v17 = vld [vmem:[%s1] sm:$0xf]
  %v18 = vld [vmem:[%s1 + $0x4] sm:$0xf]
  %v19 = vld [vmem:[%s1 + $0x8] sm:$0xf]
  %v20 = vld [vmem:[%s1 + $0xc] sm:$0xf]
  %v21 = vld [vmem:[%s1 + $0x10] sm:$0xf]
  %v22 = vld [vmem:[%s1 + $0x14] sm:$0xf]
  %v23 = vld [vmem:[%s1 + $0x18] sm:$0xf]
  %v24 = vld [vmem:[%s1 + $0x1c] sm:$0xf]
  %v25 = vld [vmem:[%s1 + $0x20] sm:$0xf]
  %v26 = vld [vmem:[%s1 + $0x24] sm:$0xf]
  %v27 = vld [vmem:[%s1 + $0x28] sm:$0xf]
  %v28 = vld [vmem:[%s1 + $0x2c] sm:$0xf]
  %v29 = vld [vmem:[%s1 + $0x30] sm:$0xf]
  %v30 = vld [vmem:[%s1 + $0x34] sm:$0xf]
  %v31 = vld [vmem:[%s1 + $0x38] sm:$0xf]
  %v32 = vld [vmem:[%s1 + $0x3c] sm:$0xf]
  %v33 = vld [vmem:[%s2] sm:$0x1]
  %v35 = vlaneseq
  %v36 = vshrl.u32 %v35, 7
  %v37 = vsub.s32 0, %v36
  %v38 = vrot.slane %v33, %v37
  %v56 = vunpack.c.l.b16 %v17
  %v57 = vunpack.c.l.b16 %v18
  %v58 = vunpack.c.l.b16 %v19
  %v59 = vunpack.c.l.b16 %v20
  %v60 = vunpack.c.l.b16 %v21
  %v61 = vunpack.c.l.b16 %v22
  %v62 = vunpack.c.l.b16 %v23
  %v63 = vunpack.c.l.b16 %v24
  %v64 = vunpack.c.l.b16 %v25
  %v65 = vunpack.c.l.b16 %v26
  %v66 = vunpack.c.l.b16 %v27
  %v67 = vunpack.c.l.b16 %v28
  %v68 = vunpack.c.l.b16 %v29
  %v69 = vunpack.c.l.b16 %v30
  %v70 = vunpack.c.l.b16 %v31
  %v71 = vunpack.c.l.b16 %v32
  %v72 = vpack.c.b16 %v57, %v56
  %v73 = vpack.c.b16 %v59, %v58
  %v74 = vpack.c.b16 %v61, %v60
  %v75 = vpack.c.b16 %v63, %v62
  %v76 = vpack.c.b16 %v65, %v64
  %v77 = vpack.c.b16 %v67, %v66
  %v78 = vpack.c.b16 %v69, %v68
  %v79 = vpack.c.b16 %v71, %v70
  %88 = vmatprep.subr.bf16.mxu0 0
  %89 = vmatpush1.bf16.msra.mxu0 %v72
  %90 = vmatprep.subr.bf16.mxu0 0
  %91 = vmatpush1.bf16.msra.mxu0 %v73
  %92 = vmatprep.subr.bf16.mxu0 0
  %93 = vmatpush1.bf16.msra.mxu0 %v74
  %94 = vmatprep.subr.bf16.mxu0 0
  %95 = vmatpush1.bf16.msra.mxu0 %v75
  %96 = vmatprep.subr.bf16.mxu0 0
  %97 = vmatpush1.bf16.msra.mxu0 %v76
  %98 = vmatprep.subr.bf16.mxu0 0
  %99 = vmatpush1.bf16.msra.mxu0 %v77
  %100 = vmatprep.subr.bf16.mxu0 0
  %101 = vmatpush1.bf16.msra.mxu0 %v78
  %102 = vmatprep.subr.bf16.mxu0 0
  %103 = vmatpush1.bf16.msra.mxu0 %v79
  %104 = vmatprep.subr.bf16.mxu0 0
  %105 = vmatpush1.bf16.msra.mxu0 0
  %106 = vmatprep.subr.bf16.mxu0 0
  %107 = vmatpush1.bf16.msra.mxu0 0
  %108 = vmatprep.subr.bf16.mxu0 0
  %109 = vmatpush1.bf16.msra.mxu0 0
  %110 = vmatprep.subr.bf16.mxu0 0
  %111 = vmatpush1.bf16.msra.mxu0 0
  %112 = vmatprep.subr.bf16.mxu0 0
  %113 = vmatpush1.bf16.msra.mxu0 0
  %114 = vmatprep.subr.bf16.mxu0 0
  %115 = vmatpush1.bf16.msra.mxu0 0
  %116 = vmatprep.subr.bf16.mxu0 0
  %117 = vmatpush1.bf16.msra.mxu0 0
  %118 = vmatprep.subr.bf16.mxu0 0
  %119 = vmatpush1.bf16.msra.mxu0 0
  %120 = vmatprep.mubr.bf16.mxu0 0
  %121 = vmatmul.mubr.bf16.gmra.mrb[0].mxu0 %v16
  %v122 = vpop.f32.mrb[0].mxu0
  %v123 = vadd.f32 %v38, %v122
  %v124 = vpop.f32.mrb[0].mxu0
  %v125 = vpop.f32.mrb[0].mxu0
  %v126 = vpop.f32.mrb[0].mxu0
  %127 = vdwg.mxu0
  %vm128 = vcmask 254976
  %129 = vst.msk [vmem:[%s3] sm:$0x3] %vm128, %v123
  // Predicated region
  $region14: #{wavenet_forward.8} parent=0 // pred_check
    _
  $region15: #{wavenet_forward.8} parent=0 // pred_check_branch
    %131 = sbr.rel (0) target = $region17
  $region16: #{wavenet_forward.8} parent=0 // pred_region
    _
  $region17: #{wavenet_forward.8} parent=0 // pred_fallthru
    _
  // Predicated region
  $region18: #{wavenet_forward.8} parent=0 // pred_check
    _
  $region19: #{wavenet_forward.8} parent=0 // pred_check_branch
    %133 = sbr.rel (0) target = $region21
  $region20: #{wavenet_forward.8} parent=0 // pred_region
    _
  $region21: #{wavenet_forward.8} parent=0 // pred_fallthru
    _

// kernel: wavenet_forward.9
$region0: #{wavenet_forward.9}
  #allocation0 [shape = 'u32[]', space=smem, size = 0x4, offset = 0x4, fixed_abs, tag = 'smem constant byte address 0x4 - core index']
  #allocation1 [shape = 'u32[144,128]{1,0:T(1,128)}', space=vmem, size = 0x12000, scoped, tag = 'internal scratch']
  %s0 = inlined_call_operand.vmem [shape: f32[2,32], index: 0, kind: input, shape index: {}]
  %s1 = inlined_call_operand.vmem [shape: bf16[32,96], index: 1, kind: input, shape index: {}]
  %s2 = inlined_call_operand.vmem [shape: f32[1,96], index: 2, kind: input, shape index: {}]
  %s3 = inlined_call_operand.vmem [shape: f32[2,96], index: 3, kind: output, shape index: {}]
  %s4 = sld [smem:[#allocation0]]
  $region22: #{wavenet_forward.9} parent=0
    _
  %s6 = ssub.s32 1, %s4
  %s7 = scalar_select 0, %s6, %s4
  // Predicated region
  $region2: #{wavenet_forward.9} parent=0 // pred_check
    _
  $region3: #{wavenet_forward.9} parent=0 // pred_check_branch
    %9 = sbr.rel (0) target = $region5
  $region4: #{wavenet_forward.9} parent=0 // pred_region
    _
  $region5: #{wavenet_forward.9} parent=0 // pred_fallthru
    _
  // Predicated region
  $region6: #{wavenet_forward.9} parent=0 // pred_check
    _
  $region7: #{wavenet_forward.9} parent=0 // pred_check_branch
    %11 = sbr.rel (0) target = $region9
  $region8: #{wavenet_forward.9} parent=0 // pred_region
    _
  $region9: #{wavenet_forward.9} parent=0 // pred_fallthru
    _
  // Predicated region
  $region10: #{wavenet_forward.9} parent=0 // pred_check
    _
  $region11: #{wavenet_forward.9} parent=0 // pred_check_branch
    %13 = sbr.rel (0) target = $region13
  $region12: #{wavenet_forward.9} parent=0 // pred_region
    _
  $region13: #{wavenet_forward.9} parent=0 // pred_fallthru
    _
  %v15 = vld [vmem:[%s0] sm:$0x3]
  %v16 = vpack.c.bf16 %v15, %v15
  %v17 = vld [vmem:[%s1] sm:$0xf]
  %v18 = vld [vmem:[%s1 + $0x4] sm:$0xf]
  %v19 = vld [vmem:[%s1 + $0x8] sm:$0xf]
  %v20 = vld [vmem:[%s1 + $0xc] sm:$0xf]
  %v21 = vld [vmem:[%s2] sm:$0x1]
  %v23 = vlaneseq
  %v24 = vshrl.u32 %v23, 7
  %v25 = vsub.s32 0, %v24
  %v26 = vrot.slane %v21, %v25
  %v32 = vunpack.c.l.b16 %v17
  %v33 = vunpack.c.l.b16 %v18
  %v34 = vunpack.c.l.b16 %v19
  %v35 = vunpack.c.l.b16 %v20
  %v36 = vpack.c.b16 %v33, %v32
  %v37 = vpack.c.b16 %v35, %v34
  %vm40 = vcmask 261120
  %v42 = vsel %vm40, %v16, 0
  %44 = vmatprep.subr.bf16.mxu0 0
  %45 = vmatpush1.bf16.msra.mxu0 %v36
  %46 = vmatprep.subr.bf16.mxu0 0
  %47 = vmatpush1.bf16.msra.mxu0 %v37
  %48 = vmatprep.subr.bf16.mxu0 0
  %49 = vmatpush1.bf16.msra.mxu0 0
  %50 = vmatprep.subr.bf16.mxu0 0
  %51 = vmatpush1.bf16.msra.mxu0 0
  %52 = vmatprep.subr.bf16.mxu0 0
  %53 = vmatpush1.bf16.msra.mxu0 0
  %54 = vmatprep.subr.bf16.mxu0 0
  %55 = vmatpush1.bf16.msra.mxu0 0
  %56 = vmatprep.subr.bf16.mxu0 0
  %57 = vmatpush1.bf16.msra.mxu0 0
  %58 = vmatprep.subr.bf16.mxu0 0
  %59 = vmatpush1.bf16.msra.mxu0 0
  %60 = vmatprep.subr.bf16.mxu0 0
  %61 = vmatpush1.bf16.msra.mxu0 0
  %62 = vmatprep.subr.bf16.mxu0 0
  %63 = vmatpush1.bf16.msra.mxu0 0
  %64 = vmatprep.subr.bf16.mxu0 0
  %65 = vmatpush1.bf16.msra.mxu0 0
  %66 = vmatprep.subr.bf16.mxu0 0
  %67 = vmatpush1.bf16.msra.mxu0 0
  %68 = vmatprep.subr.bf16.mxu0 0
  %69 = vmatpush1.bf16.msra.mxu0 0
  %70 = vmatprep.subr.bf16.mxu0 0
  %71 = vmatpush1.bf16.msra.mxu0 0
  %72 = vmatprep.subr.bf16.mxu0 0
  %73 = vmatpush1.bf16.msra.mxu0 0
  %74 = vmatprep.subr.bf16.mxu0 0
  %75 = vmatpush1.bf16.msra.mxu0 0
  %76 = vmatprep.mubr.bf16.mxu0 0
  %77 = vmatmul.mubr.bf16.gmra.mrb[0].mxu0 %v42
  %v78 = vpop.f32.mrb[0].mxu0
  %v79 = vadd.f32 %v26, %v78
  %v80 = vpop.f32.mrb[0].mxu0
  %v81 = vpop.f32.mrb[0].mxu0
  %v82 = vpop.f32.mrb[0].mxu0
  %83 = vdwg.mxu0
  %vm84 = vcmask 779264
  %85 = vst.msk [vmem:[%s3] sm:$0x3] %vm84, %v79
  // Predicated region
  $region14: #{wavenet_forward.9} parent=0 // pred_check
    _
  $region15: #{wavenet_forward.9} parent=0 // pred_check_branch
    %87 = sbr.rel (0) target = $region17
  $region16: #{wavenet_forward.9} parent=0 // pred_region
    _
  $region17: #{wavenet_forward.9} parent=0 // pred_fallthru
    _
  // Predicated region
  $region18: #{wavenet_forward.9} parent=0 // pred_check
    _
  $region19: #{wavenet_forward.9} parent=0 // pred_check_branch
    %89 = sbr.rel (0) target = $region21
  $region20: #{wavenet_forward.9} parent=0 // pred_region
    _
  $region21: #{wavenet_forward.9} parent=0 // pred_fallthru
    _

// kernel: wavenet_forward.11
$region0: #{wavenet_forward.11}
  #allocation0 [shape = 'u32[]', space=smem, size = 0x4, offset = 0x4, fixed_abs, tag = 'smem constant byte address 0x4 - core index']
  #allocation1 [shape = 'u32[144,128]{1,0:T(1,128)}', space=vmem, size = 0x12000, scoped, tag = 'internal scratch']
  %s0 = inlined_call_operand.vmem [shape: f32[32,32], index: 0, kind: input, shape index: {}]
  %s1 = inlined_call_operand.vmem [shape: bf16[32,32], index: 1, kind: input, shape index: {}]
  %s2 = inlined_call_operand.vmem [shape: f32[1,32], index: 2, kind: input, shape index: {}]
  %s3 = inlined_call_operand.vmem [shape: bf16[32,128], index: 3, kind: input, shape index: {}]
  %s4 = inlined_call_operand.vmem [shape: f32[1,128], index: 4, kind: input, shape index: {}]
  %s5 = inlined_call_operand.hbm [shape: f32[32,32], index: 5, kind: output, shape index: {0}]
  %s6 = inlined_call_operand.vmem [shape: f32[32,128], index: 6, kind: output, shape index: {1}]
  %7 = xla_tuple %s5, %s6
  %s8 = sld [smem:[#allocation0]]
  $region38: #{wavenet_forward.11} parent=0
    _
  %s10 = ssub.s32 1, %s8
  %s11 = scalar_select 0, %s10, %s8
  $region1: #{wavenet_forward.11} parent=0
    #allocation2 [shape = 'u8[16384]{0}', space=vmem, size = 0x4000, scoped, tag = 'output window, operand 0, single buffered']
    #allocation3 [shape = 's32[1]{0}', space=sflag, size = 0x4, scoped, tag = 'scoped memory for wavenet_forward.11']
    %12 = vsyncpa [#allocation3], 0
    // Predicated region
    $region2: #{wavenet_forward.11} parent=1 // pred_check
      _
    $region3: #{wavenet_forward.11} parent=1 // pred_check_branch
      %14 = sbr.rel (0) target = $region5
    $region4: #{wavenet_forward.11} parent=1 // pred_region
      _
    $region5: #{wavenet_forward.11} parent=1 // pred_fallthru
      _
    // Predicated region
    $region6: #{wavenet_forward.11} parent=1 // pred_check
      _
    $region7: #{wavenet_forward.11} parent=1 // pred_check_branch
      %16 = sbr.rel (0) target = $region9
    $region8: #{wavenet_forward.11} parent=1 // pred_region
      _
    $region9: #{wavenet_forward.11} parent=1 // pred_fallthru
      _
    // Predicated region
    $region10: #{wavenet_forward.11} parent=1 // pred_check
      _
    $region11: #{wavenet_forward.11} parent=1 // pred_check_branch
      %18 = sbr.rel (0) target = $region13
    $region12: #{wavenet_forward.11} parent=1 // pred_region
      _
    $region13: #{wavenet_forward.11} parent=1 // pred_fallthru
      _
    // Predicated region
    $region14: #{wavenet_forward.11} parent=1 // pred_check
      _
    $region15: #{wavenet_forward.11} parent=1 // pred_check_branch
      %20 = sbr.rel (0) target = $region17
    $region16: #{wavenet_forward.11} parent=1 // pred_region
      _
    $region17: #{wavenet_forward.11} parent=1 // pred_fallthru
      _
    // Predicated region
    $region18: #{wavenet_forward.11} parent=1 // pred_check
      _
    $region19: #{wavenet_forward.11} parent=1 // pred_check_branch
      %22 = sbr.rel (0) target = $region21
    $region20: #{wavenet_forward.11} parent=1 // pred_region
      _
    $region21: #{wavenet_forward.11} parent=1 // pred_fallthru
      _
    %v24 = vld [vmem:[%s0] sm:$0xff]
    %v25 = vld [vmem:[%s0 + $0x8] sm:$0xff]
    %v26 = vld [vmem:[%s0 + $0x10] sm:$0xff]
    %v27 = vld [vmem:[%s0 + $0x18] sm:$0xff]
    %v28 = vpack.c.bf16 %v25, %v24
    %v29 = vpack.c.bf16 %v27, %v26
    %v30 = vld [vmem:[%s1] sm:$0xf]
    %v31 = vld [vmem:[%s1 + $0x4] sm:$0xf]
    %v32 = vld [vmem:[%s1 + $0x8] sm:$0xf]
    %v33 = vld [vmem:[%s1 + $0xc] sm:$0xf]
    %v34 = vld [vmem:[%s2] sm:$0x1]
    %v36 = vlaneseq
    %v37 = vshrl.u32 %v36, 7
    %v38 = vsub.s32 0, %v37
    %v39 = vrot.slane %v34, %v38
    %v45 = vunpack.c.l.b16 %v30
    %v46 = vunpack.c.l.b16 %v31
    %v47 = vunpack.c.l.b16 %v32
    %v48 = vunpack.c.l.b16 %v33
    %v49 = vpack.c.b16 %v46, %v45
    %v50 = vpack.c.b16 %v48, %v47
    %vm53 = vcmask 261120
    %v55 = vsel %vm53, %v28, 0
    %v58 = vsel %vm53, %v29, 0
    %60 = vmatprep.subr.bf16.mxu0 0
    %61 = vmatpush1.bf16.msra.mxu0 %v49
    %62 = vmatprep.subr.bf16.mxu0 0
    %63 = vmatpush1.bf16.msra.mxu0 %v50
    %64 = vmatprep.subr.bf16.mxu0 0
    %65 = vmatpush1.bf16.msra.mxu0 0
    %66 = vmatprep.subr.bf16.mxu0 0
    %67 = vmatpush1.bf16.msra.mxu0 0
    %68 = vmatprep.subr.bf16.mxu0 0
    %69 = vmatpush1.bf16.msra.mxu0 0
    %70 = vmatprep.subr.bf16.mxu0 0
    %71 = vmatpush1.bf16.msra.mxu0 0
    %72 = vmatprep.subr.bf16.mxu0 0
    %73 = vmatpush1.bf16.msra.mxu0 0
    %74 = vmatprep.subr.bf16.mxu0 0
    %75 = vmatpush1.bf16.msra.mxu0 0
    %76 = vmatprep.subr.bf16.mxu0 0
    %77 = vmatpush1.bf16.msra.mxu0 0
    %78 = vmatprep.subr.bf16.mxu0 0
    %79 = vmatpush1.bf16.msra.mxu0 0
    %80 = vmatprep.subr.bf16.mxu0 0
    %81 = vmatpush1.bf16.msra.mxu0 0
    %82 = vmatprep.subr.bf16.mxu0 0
    %83 = vmatpush1.bf16.msra.mxu0 0
    %84 = vmatprep.subr.bf16.mxu0 0
    %85 = vmatpush1.bf16.msra.mxu0 0
    %86 = vmatprep.subr.bf16.mxu0 0
    %87 = vmatpush1.bf16.msra.mxu0 0
    %88 = vmatprep.subr.bf16.mxu0 0
    %89 = vmatpush1.bf16.msra.mxu0 0
    %90 = vmatprep.subr.bf16.mxu0 0
    %91 = vmatpush1.bf16.msra.mxu0 0
    %92 = vmatprep.mubr.bf16.mxu0 0
    %93 = vmatmul.mubr.bf16.gmra.mrb[0].mxu0 %v55
    %v94 = vpop.f32.mrb[0].mxu0
    %v95 = vadd.f32 %v39, %v94
    %v96 = vpop.f32.mrb[0].mxu0
    %v97 = vpop.f32.mrb[0].mxu0
    %v98 = vadd.f32 %v39, %v97
    %v99 = vpop.f32.mrb[0].mxu0
    %100 = vmatprep.mubr.bf16.mxu0 0
    %101 = vmatmul.mubr.bf16.gmra.mrb[0].mxu0 %v58
    %v102 = vpop.f32.mrb[0].mxu0
    %v103 = vadd.f32 %v39, %v102
    %v104 = vpop.f32.mrb[0].mxu0
    %v105 = vpop.f32.mrb[0].mxu0
    %v106 = vadd.f32 %v39, %v105
    %v107 = vpop.f32.mrb[0].mxu0
    %108 = vdwg.mxu0
    %v109 = vmax.f32 %v95, 0.0
    %v110 = vmax.f32 %v98, 0.0
    %v111 = vmax.f32 %v103, 0.0
    %v112 = vmax.f32 %v106, 0.0
    %113 = vst.msk [vmem:[#allocation2] sm:$0xff] %vm53, %v109
    %114 = vst.msk [vmem:[#allocation2 + $0x8] sm:$0xff] %vm53, %v110
    %115 = vst.msk [vmem:[#allocation2 + $0x10] sm:$0xff] %vm53, %v111
    %116 = vst.msk [vmem:[#allocation2 + $0x18] sm:$0xff] %vm53, %v112
    %v117 = vpack.c.bf16 %v110, %v109
    %v118 = vpack.c.bf16 %v112, %v111
    %v119 = vld [vmem:[%s3] sm:$0xf]
    %v120 = vld [vmem:[%s3 + $0x4] sm:$0xf]
    %v121 = vld [vmem:[%s3 + $0x8] sm:$0xf]
    %v122 = vld [vmem:[%s3 + $0xc] sm:$0xf]
    %v123 = vld [vmem:[%s4] sm:$0x1]
    %v125 = vlaneseq
    %v126 = vshrl.u32 %v125, 7
    %v127 = vsub.s32 0, %v126
    %v128 = vrot.slane %v123, %v127
    %v134 = vunpack.c.l.b16 %v119
    %v135 = vunpack.c.l.b16 %v120
    %v136 = vunpack.c.l.b16 %v121
    %v137 = vunpack.c.l.b16 %v122
    %v138 = vpack.c.b16 %v135, %v134
    %v139 = vpack.c.b16 %v137, %v136
    %v143 = vsel %vm53, %v117, 0
    %v146 = vsel %vm53, %v118, 0
    %148 = vmatprep.subr.bf16.mxu0 0
    %149 = vmatpush1.bf16.msra.mxu0 %v138
    %150 = vmatprep.subr.bf16.mxu0 0
    %151 = vmatpush1.bf16.msra.mxu0 %v139
    %152 = vmatprep.subr.bf16.mxu0 0
    %153 = vmatpush1.bf16.msra.mxu0 0
    %154 = vmatprep.subr.bf16.mxu0 0
    %155 = vmatpush1.bf16.msra.mxu0 0
    %156 = vmatprep.subr.bf16.mxu0 0
    %157 = vmatpush1.bf16.msra.mxu0 0
    %158 = vmatprep.subr.bf16.mxu0 0
    %159 = vmatpush1.bf16.msra.mxu0 0
    %160 = vmatprep.subr.bf16.mxu0 0
    %161 = vmatpush1.bf16.msra.mxu0 0
    %162 = vmatprep.subr.bf16.mxu0 0
    %163 = vmatpush1.bf16.msra.mxu0 0
    %164 = vmatprep.subr.bf16.mxu0 0
    %165 = vmatpush1.bf16.msra.mxu0 0
    %166 = vmatprep.subr.bf16.mxu0 0
    %167 = vmatpush1.bf16.msra.mxu0 0
    %168 = vmatprep.subr.bf16.mxu0 0
    %169 = vmatpush1.bf16.msra.mxu0 0
    %170 = vmatprep.subr.bf16.mxu0 0
    %171 = vmatpush1.bf16.msra.mxu0 0
    %172 = vmatprep.subr.bf16.mxu0 0
    %173 = vmatpush1.bf16.msra.mxu0 0
    %174 = vmatprep.subr.bf16.mxu0 0
    %175 = vmatpush1.bf16.msra.mxu0 0
    %176 = vmatprep.subr.bf16.mxu0 0
    %177 = vmatpush1.bf16.msra.mxu0 0
    %178 = vmatprep.subr.bf16.mxu0 0
    %179 = vmatpush1.bf16.msra.mxu0 0
    %180 = vmatprep.mubr.bf16.mxu0 0
    %181 = vmatmul.mubr.bf16.gmra.mrb[0].mxu0 %v143
    %v182 = vpop.f32.mrb[0].mxu0
    %v183 = vadd.f32 %v128, %v182
    %v184 = vpop.f32.mrb[0].mxu0
    %v185 = vpop.f32.mrb[0].mxu0
    %v186 = vadd.f32 %v128, %v185
    %v187 = vpop.f32.mrb[0].mxu0
    %188 = vmatprep.mubr.bf16.mxu0 0
    %189 = vmatmul.mubr.bf16.gmra.mrb[0].mxu0 %v146
    %v190 = vpop.f32.mrb[0].mxu0
    %v191 = vadd.f32 %v128, %v190
    %v192 = vpop.f32.mrb[0].mxu0
    %v193 = vpop.f32.mrb[0].mxu0
    %v194 = vadd.f32 %v128, %v193
    %v195 = vpop.f32.mrb[0].mxu0
    %196 = vdwg.mxu0
    %197 = vst [vmem:[%s6] sm:$0xff] %v183
    %198 = vst [vmem:[%s6 + $0x8] sm:$0xff] %v186
    %199 = vst [vmem:[%s6 + $0x10] sm:$0xff] %v191
    %200 = vst [vmem:[%s6 + $0x18] sm:$0xff] %v194
    // Predicated region
    $region22: #{wavenet_forward.11} parent=1 // pred_check
      _
    $region23: #{wavenet_forward.11} parent=1 // pred_check_branch
      %202 = sbr.rel (0) target = $region25
    $region24: #{wavenet_forward.11} parent=1 // pred_region
      %s204 = ssub.s32 512, 512
      %205 = vsyncadd [#allocation3], %s204
      %s206 = sshll.u32 [#allocation2], 4
      %s207 = int_to_ptr.vmem [resolvable:$true] %s206
      %212 = dma.vmem_to_hbm [thread:$0]  %s207, 512, %s5, [#allocation3], 128, 128, 8
    $region25: #{wavenet_forward.11} parent=1 // pred_fallthru
      _
    // Predicated region
    $region26: #{wavenet_forward.11} parent=1 // pred_check
      _
    $region27: #{wavenet_forward.11} parent=1 // pred_check_branch
      %214 = sbr.rel (0) target = $region29
    $region28: #{wavenet_forward.11} parent=1 // pred_region
      _
    $region29: #{wavenet_forward.11} parent=1 // pred_fallthru
      _
    // Predicated region
    $region30: #{wavenet_forward.11} parent=1 // pred_check
      _
    $region31: #{wavenet_forward.11} parent=1 // pred_check_branch
      %216 = sbr.rel (0) target = $region33
    $region32: #{wavenet_forward.11} parent=1 // pred_region
      %217 = dma.done [#allocation3], 512
    $region33: #{wavenet_forward.11} parent=1 // pred_fallthru
      _
    // Predicated region
    $region34: #{wavenet_forward.11} parent=1 // pred_check
      _
    $region35: #{wavenet_forward.11} parent=1 // pred_check_branch
      %219 = sbr.rel (0) target = $region37
    $region36: #{wavenet_forward.11} parent=1 // pred_region
      _
    $region37: #{wavenet_forward.11} parent=1 // pred_fallthru
      _
    %220 = vsyncpa [#allocation3], 1

// kernel: wavenet_forward.10
$region0: #{wavenet_forward.10}
  #allocation0 [shape = 'u32[]', space=smem, size = 0x4, offset = 0x4, fixed_abs, tag = 'smem constant byte address 0x4 - core index']
  #allocation1 [shape = 'u32[144,128]{1,0:T(1,128)}', space=vmem, size = 0x12000, scoped, tag = 'internal scratch']
  %s0 = inlined_call_operand.vmem [shape: f32[2,16,32], index: 0, kind: input, shape index: {}]
  %s1 = inlined_call_operand.vmem [shape: bf16[2,16,16], index: 1, kind: input, shape index: {}]
  %s2 = inlined_call_operand.vmem [shape: f32[2,3,1,32], index: 2, kind: input, shape index: {}]
  %s3 = inlined_call_operand.vmem [shape: bf16[9,32,64], index: 3, kind: input, shape index: {}]
  %s4 = inlined_call_operand.vmem [shape: bf16[3,16,64], index: 4, kind: input, shape index: {}]
  %s5 = inlined_call_operand.vmem [shape: bf16[3,32,64], index: 5, kind: input, shape index: {}]
  %s6 = inlined_call_operand.vmem [shape: f32[3,1,64], index: 6, kind: input, shape index: {}]
  %s7 = inlined_call_operand.vmem [shape: f32[3,1,64], index: 7, kind: input, shape index: {}]
  %s8 = inlined_call_operand.hbm [shape: f32[2,16,32], index: 8, kind: output, shape index: {0}]
  %s9 = inlined_call_operand.vmem [shape: f32[2,16,32], index: 9, kind: output, shape index: {1}]
  %10 = xla_tuple %s8, %s9
  %s11 = sld [smem:[#allocation0]]
  $region77: #{wavenet_forward.10} parent=0
    _
  %s13 = ssub.s32 1, %s11
  %s14 = scalar_select 0, %s13, %s11
  $region1: #{wavenet_forward.10} parent=0
    #allocation2 [shape = 'u8[16384]{0}', space=vmem, size = 0x4000, scoped, tag = 'output window, operand 0']
    #allocation3 [shape = 's32[2]{0}', space=sflag, size = 0x8, scoped, tag = 'scoped memory for wavenet_forward.10']
    %15 = vsyncpa [#allocation3], 0
    %s16 = scalar_lea.sflag [#allocation3], 1
    %17 = vsyncpa %s16, 0
    loop: start=0, step=1, limit=8
    $region2: #{wavenet_forward.10} parent=1 // loop_pre_header
      _
    $region3: #{wavenet_forward.10} parent=1 // loop_header
      %s19 = sphi 0, %s23
      %p20 = scmp.ge.s32.totalorder %s19, 8
      %s26 = sphi 0, %s38
      %s27 = sphi 0, %s34
      %s28 = sphi 0, %s26
      %s29 = sphi 0, %s27
      %s30 = sphi 0, %s28
      %s31 = sphi 0, %s29
      %s41 = sphi 0, %s43
      %s44 = sphi 0, %s41
      %s45 = sphi 0, %s44
      %s61 = sphi 0, %s45
      %s67 = sphi 0, %s69
      %s70 = sphi 0, %s67
      %s71 = sphi 0, %s70
      %s87 = sphi 0, %s71
      %s95 = sphi 0, %s97
      %s98 = sphi 0, %s95
      %s99 = sphi 0, %s98
      %s115 = sphi 0, %s99
      %s121 = sphi 0, %s123
      %s124 = sphi 0, %s121
      %s125 = sphi 0, %s124
      %s141 = sphi 0, %s125
      %s147 = sphi 0, %s149
      %s150 = sphi 0, %s147
      %s151 = sphi 0, %s150
      %s167 = sphi 0, %s151
      %s173 = sphi 0, %s175
      %s176 = sphi 0, %s173
      %s177 = sphi 0, %s176
      %s193 = sphi 0, %s177
      %s199 = sphi 0, %s201
      %s202 = sphi 0, %s199
      %s203 = sphi 0, %s202
      %s219 = sphi 0, %s203
      %s225 = sphi 0, %s227
      %s228 = sphi 0, %s225
      %s229 = sphi 0, %s228
      %s245 = sphi 0, %s229
      %s251 = sphi 0, %s253
      %s254 = sphi 0, %s251
      %s255 = sphi 0, %s254
      %s271 = sphi 0, %s255
      %s277 = sphi 0, %s279
      %s280 = sphi 0, %s277
      %s281 = sphi 0, %s280
      %s297 = sphi 0, %s281
    $region4: #{wavenet_forward.10} parent=1 // loop_header_branch
      %22 = sbr.rel (%p20) target = $region8
    $region5: #{wavenet_forward.10} parent=1 // loop_body
      %s24 = ssub.s32 %s19, 1
      %s25 = ssub.s32 %s19, 2
      %s32 = sadd.s32 1, %s27
      %p33 = scmp.ge.s32.totalorder %s32, 3
      %s34 = scalar_select %p33, 0, %s32
      %s35 = sadd.s32 1, %s26
      %s36 = scalar_select %p33, %s35, %s26
      %p37 = scmp.ge.s32.totalorder %s36, 2
      %s38 = scalar_select %p37, 0, %s36
      %s39 = ssub.s32 %s26, %s38
      %p40 = scmp.eq.s32.totalorder %s39, 0
      %s42 = sadd.s32 %s41, 1
      %s43 = scalar_select %p40, %s41, %s42
      %p46 = pneg %p40
      %p47 = scmp.eq.s32.totalorder %s19, 5
      %p48 = por %p46, %p47
      %p49 = scmp.ne.s32.totalorder %s41, %s44
      %p50 = scmp.eq.s32.totalorder %s19, 0
      %p51 = por %p49, %p50
      %p52 = scmp.ne.s32.totalorder %s41, %s44
      %p53 = scmp.eq.s32.totalorder %s24, 5
      %p54 = por %p52, %p53
      %p55 = scmp.ne.s32.totalorder %s44, %s45
      %p56 = scmp.eq.s32.totalorder %s24, 0
      %p57 = por %p55, %p56
      %p58 = scmp.ne.s32.totalorder %s44, %s45
      %p59 = scmp.eq.s32.totalorder %s25, 5
      %p60 = por %p58, %p59
      %p62 = scmp.ne.s32.totalorder %s45, %s61
      %p63 = scmp.eq.s32.totalorder %s25, 0
      %p64 = por %p62, %p63
      %s65 = ssub.s32 %s26, %s38
      %p66 = scmp.eq.s32.totalorder %s65, 0
      %s68 = sadd.s32 %s67, 1
      %s69 = scalar_select %p66, %s67, %s68
      %p72 = pneg %p66
      %p73 = scmp.eq.s32.totalorder %s19, 5
      %p74 = por %p72, %p73
      %p75 = scmp.ne.s32.totalorder %s67, %s70
      %p76 = scmp.eq.s32.totalorder %s19, 0
      %p77 = por %p75, %p76
      %p78 = scmp.ne.s32.totalorder %s67, %s70
      %p79 = scmp.eq.s32.totalorder %s24, 5
      %p80 = por %p78, %p79
      %p81 = scmp.ne.s32.totalorder %s70, %s71
      %p82 = scmp.eq.s32.totalorder %s24, 0
      %p83 = por %p81, %p82
      %p84 = scmp.ne.s32.totalorder %s70, %s71
      %p85 = scmp.eq.s32.totalorder %s25, 5
      %p86 = por %p84, %p85
      %p88 = scmp.ne.s32.totalorder %s71, %s87
      %p89 = scmp.eq.s32.totalorder %s25, 0
      %p90 = por %p88, %p89
      %s91 = ssub.s32 %s26, %s38
      %s92 = ssub.s32 %s27, %s34
      %s93 = sor.u32 %s91, %s92
      %p94 = scmp.eq.s32.totalorder %s93, 0
      %s96 = sadd.s32 %s95, 1
      %s97 = scalar_select %p94, %s95, %s96
      %p100 = pneg %p94
      %p101 = scmp.eq.s32.totalorder %s19, 5
      %p102 = por %p100, %p101
      %p103 = scmp.ne.s32.totalorder %s95, %s98
      %p104 = scmp.eq.s32.totalorder %s19, 0
      %p105 = por %p103, %p104
      %p106 = scmp.ne.s32.totalorder %s95, %s98
      %p107 = scmp.eq.s32.totalorder %s24, 5
      %p108 = por %p106, %p107
      %p109 = scmp.ne.s32.totalorder %s98, %s99
      %p110 = scmp.eq.s32.totalorder %s24, 0
      %p111 = por %p109, %p110
      %p112 = scmp.ne.s32.totalorder %s98, %s99
      %p113 = scmp.eq.s32.totalorder %s25, 5
      %p114 = por %p112, %p113
      %p116 = scmp.ne.s32.totalorder %s99, %s115
      %p117 = scmp.eq.s32.totalorder %s25, 0
      %p118 = por %p116, %p117
      %s119 = ssub.s32 %s27, %s34
      %p120 = scmp.eq.s32.totalorder %s119, 0
      %s122 = sadd.s32 %s121, 1
      %s123 = scalar_select %p120, %s121, %s122
      %p126 = pneg %p120
      %p127 = scmp.eq.s32.totalorder %s19, 5
      %p128 = por %p126, %p127
      %p129 = scmp.ne.s32.totalorder %s121, %s124
      %p130 = scmp.eq.s32.totalorder %s19, 0
      %p131 = por %p129, %p130
      %p132 = scmp.ne.s32.totalorder %s121, %s124
      %p133 = scmp.eq.s32.totalorder %s24, 5
      %p134 = por %p132, %p133
      %p135 = scmp.ne.s32.totalorder %s124, %s125
      %p136 = scmp.eq.s32.totalorder %s24, 0
      %p137 = por %p135, %p136
      %p138 = scmp.ne.s32.totalorder %s124, %s125
      %p139 = scmp.eq.s32.totalorder %s25, 5
      %p140 = por %p138, %p139
      %p142 = scmp.ne.s32.totalorder %s125, %s141
      %p143 = scmp.eq.s32.totalorder %s25, 0
      %p144 = por %p142, %p143
      %s145 = ssub.s32 %s27, %s34
      %p146 = scmp.eq.s32.totalorder %s145, 0
      %s148 = sadd.s32 %s147, 1
      %s149 = scalar_select %p146, %s147, %s148
      %p152 = pneg %p146
      %p153 = scmp.eq.s32.totalorder %s19, 5
      %p154 = por %p152, %p153
      %p155 = scmp.ne.s32.totalorder %s147, %s150
      %p156 = scmp.eq.s32.totalorder %s19, 0
      %p157 = por %p155, %p156
      %p158 = scmp.ne.s32.totalorder %s147, %s150
      %p159 = scmp.eq.s32.totalorder %s24, 5
      %p160 = por %p158, %p159
      %p161 = scmp.ne.s32.totalorder %s150, %s151
      %p162 = scmp.eq.s32.totalorder %s24, 0
      %p163 = por %p161, %p162
      %p164 = scmp.ne.s32.totalorder %s150, %s151
      %p165 = scmp.eq.s32.totalorder %s25, 5
      %p166 = por %p164, %p165
      %p168 = scmp.ne.s32.totalorder %s151, %s167
      %p169 = scmp.eq.s32.totalorder %s25, 0
      %p170 = por %p168, %p169
      %s171 = ssub.s32 %s27, %s34
      %p172 = scmp.eq.s32.totalorder %s171, 0
      %s174 = sadd.s32 %s173, 1
      %s175 = scalar_select %p172, %s173, %s174
      %p178 = pneg %p172
      %p179 = scmp.eq.s32.totalorder %s19, 5
      %p180 = por %p178, %p179
      %p181 = scmp.ne.s32.totalorder %s173, %s176
      %p182 = scmp.eq.s32.totalorder %s19, 0
      %p183 = por %p181, %p182
      %p184 = scmp.ne.s32.totalorder %s173, %s176
      %p185 = scmp.eq.s32.totalorder %s24, 5
      %p186 = por %p184, %p185
      %p187 = scmp.ne.s32.totalorder %s176, %s177
      %p188 = scmp.eq.s32.totalorder %s24, 0
      %p189 = por %p187, %p188
      %p190 = scmp.ne.s32.totalorder %s176, %s177
      %p191 = scmp.eq.s32.totalorder %s25, 5
      %p192 = por %p190, %p191
      %p194 = scmp.ne.s32.totalorder %s177, %s193
      %p195 = scmp.eq.s32.totalorder %s25, 0
      %p196 = por %p194, %p195
      %s197 = ssub.s32 %s27, %s34
      %p198 = scmp.eq.s32.totalorder %s197, 0
      %s200 = sadd.s32 %s199, 1
      %s201 = scalar_select %p198, %s199, %s200
      %p204 = pneg %p198
      %p205 = scmp.eq.s32.totalorder %s19, 5
      %p206 = por %p204, %p205
      %p207 = scmp.ne.s32.totalorder %s199, %s202
      %p208 = scmp.eq.s32.totalorder %s19, 0
      %p209 = por %p207, %p208
      %p210 = scmp.ne.s32.totalorder %s199, %s202
      %p211 = scmp.eq.s32.totalorder %s24, 5
      %p212 = por %p210, %p211
      %p213 = scmp.ne.s32.totalorder %s202, %s203
      %p214 = scmp.eq.s32.totalorder %s24, 0
      %p215 = por %p213, %p214
      %p216 = scmp.ne.s32.totalorder %s202, %s203
      %p217 = scmp.eq.s32.totalorder %s25, 5
      %p218 = por %p216, %p217
      %p220 = scmp.ne.s32.totalorder %s203, %s219
      %p221 = scmp.eq.s32.totalorder %s25, 0
      %p222 = por %p220, %p221
      %s223 = ssub.s32 %s27, %s34
      %p224 = scmp.eq.s32.totalorder %s223, 0
      %s226 = sadd.s32 %s225, 1
      %s227 = scalar_select %p224, %s225, %s226
      %p230 = pneg %p224
      %p231 = scmp.eq.s32.totalorder %s19, 5
      %p232 = por %p230, %p231
      %p233 = scmp.ne.s32.totalorder %s225, %s228
      %p234 = scmp.eq.s32.totalorder %s19, 0
      %p235 = por %p233, %p234
      %p236 = scmp.ne.s32.totalorder %s225, %s228
      %p237 = scmp.eq.s32.totalorder %s24, 5
      %p238 = por %p236, %p237
      %p239 = scmp.ne.s32.totalorder %s228, %s229
      %p240 = scmp.eq.s32.totalorder %s24, 0
      %p241 = por %p239, %p240
      %p242 = scmp.ne.s32.totalorder %s228, %s229
      %p243 = scmp.eq.s32.totalorder %s25, 5
      %p244 = por %p242, %p243
      %p246 = scmp.ne.s32.totalorder %s229, %s245
      %p247 = scmp.eq.s32.totalorder %s25, 0
      %p248 = por %p246, %p247
      %s249 = ssub.s32 %s26, %s38
      %p250 = scmp.eq.s32.totalorder %s249, 0
      %s252 = sadd.s32 %s251, 1
      %s253 = scalar_select %p250, %s251, %s252
      %p256 = pneg %p250
      %p257 = scmp.eq.s32.totalorder %s19, 5
      %p258 = por %p256, %p257
      %p259 = scmp.ne.s32.totalorder %s251, %s254
      %p260 = scmp.eq.s32.totalorder %s19, 0
      %p261 = por %p259, %p260
      %p262 = scmp.ne.s32.totalorder %s251, %s254
      %p263 = scmp.eq.s32.totalorder %s24, 5
      %p264 = por %p262, %p263
      %p265 = scmp.ne.s32.totalorder %s254, %s255
      %p266 = scmp.eq.s32.totalorder %s24, 0
      %p267 = por %p265, %p266
      %p268 = scmp.ne.s32.totalorder %s254, %s255
      %p269 = scmp.eq.s32.totalorder %s25, 5
      %p270 = por %p268, %p269
      %p272 = scmp.ne.s32.totalorder %s255, %s271
      %p273 = scmp.eq.s32.totalorder %s25, 0
      %p274 = por %p272, %p273
      %s275 = ssub.s32 %s26, %s38
      %p276 = scmp.eq.s32.totalorder %s275, 0
      %s278 = sadd.s32 %s277, 1
      %s279 = scalar_select %p276, %s277, %s278
      %p282 = pneg %p276
      %p283 = scmp.eq.s32.totalorder %s19, 5
      %p284 = por %p282, %p283
      %p285 = scmp.ne.s32.totalorder %s277, %s280
      %p286 = scmp.eq.s32.totalorder %s19, 0
      %p287 = por %p285, %p286
      %p288 = scmp.ne.s32.totalorder %s277, %s280
      %p289 = scmp.eq.s32.totalorder %s24, 5
      %p290 = por %p288, %p289
      %p291 = scmp.ne.s32.totalorder %s280, %s281
      %p292 = scmp.eq.s32.totalorder %s24, 0
      %p293 = por %p291, %p292
      %p294 = scmp.ne.s32.totalorder %s280, %s281
      %p295 = scmp.eq.s32.totalorder %s25, 5
      %p296 = por %p294, %p295
      %p298 = scmp.ne.s32.totalorder %s281, %s297
      %p299 = scmp.eq.s32.totalorder %s25, 0
      %p300 = por %p298, %p299
      %p301 = scmp.le.s32.totalorder 1, %s19
      %p302 = scmp.lt.s32.totalorder %s19, 7
      %p303 = pnand %p301, %p302
      %p304 = pneg %p303
      // Predicated region
      $region9: #{wavenet_forward.10} parent=5 // pred_check
        _
      $region10: #{wavenet_forward.10} parent=5 // pred_check_branch
        %306 = sbr.rel (%p303) target = $region12
      $region11: #{wavenet_forward.10} parent=5 // pred_region
        %s307 = ssub.s32 %s19, 1
      $region12: #{wavenet_forward.10} parent=5 // pred_fallthru
        _
      %p308 = scmp.lt.s32.totalorder %s19, 6
      // Predicated region
      $region13: #{wavenet_forward.10} parent=5 // pred_check
        %p309 = pneg %p308
      $region14: #{wavenet_forward.10} parent=5 // pred_check_branch
        %311 = sbr.rel (%p309) target = $region16
      $region15: #{wavenet_forward.10} parent=5 // pred_region
        // Predicated region
        $region17: #{wavenet_forward.10} parent=15 // pred_check
          %p312 = pneg %p51
        $region18: #{wavenet_forward.10} parent=15 // pred_check_branch
          %314 = sbr.rel (%p312) target = $region20
        $region19: #{wavenet_forward.10} parent=15 // pred_region
          %p315 = scmp.lt.s32.totalorder %s26, 1
          %s316 = scalar_select %p315, %s26, 1
          %s317 = smul.addr %s316, 2
          %s318 = smul.addr %s317, 8
          %s319 = scalar_lea.vmem %s0, %s318
        $region20: #{wavenet_forward.10} parent=15 // pred_fallthru
          _
        // Predicated region
        $region21: #{wavenet_forward.10} parent=15 // pred_check
          %p320 = pneg %p77
        $region22: #{wavenet_forward.10} parent=15 // pred_check_branch
          %322 = sbr.rel (%p320) target = $region24
        $region23: #{wavenet_forward.10} parent=15 // pred_region
          %p323 = scmp.lt.s32.totalorder %s26, 1
          %s324 = scalar_select %p323, %s26, 1
          %s325 = smul.addr %s324, 2
          %s326 = smul.addr %s325, 4
          %s327 = scalar_lea.vmem %s1, %s326
        $region24: #{wavenet_forward.10} parent=15 // pred_fallthru
          _
        // Predicated region
        $region25: #{wavenet_forward.10} parent=15 // pred_check
          %p328 = pneg %p105
        $region26: #{wavenet_forward.10} parent=15 // pred_check_branch
          %330 = sbr.rel (%p328) target = $region28
        $region27: #{wavenet_forward.10} parent=15 // pred_region
          %p331 = scmp.lt.s32.totalorder %s26, 1
          %s332 = scalar_select %p331, %s26, 1
          %p333 = scmp.lt.s32.totalorder %s27, 2
          %s334 = scalar_select %p333, %s27, 2
          %s335 = smul.addr %s332, 3
          %s336 = sadd.s32 %s334, %s335
          %s337 = scalar_lea.vmem %s2, %s336
        $region28: #{wavenet_forward.10} parent=15 // pred_fallthru
          _
        // Predicated region
        $region29: #{wavenet_forward.10} parent=15 // pred_check
          %p338 = pneg %p131
        $region30: #{wavenet_forward.10} parent=15 // pred_check_branch
          %340 = sbr.rel (%p338) target = $region32
        $region31: #{wavenet_forward.10} parent=15 // pred_region
          %s341 = smul.u32 3, %s27
          %p342 = scmp.lt.s32.totalorder %s341, 8
          %s343 = scalar_select %p342, %s341, 8
          %s344 = smul.addr %s343, 4
          %s345 = smul.addr %s344, 4
          %s346 = scalar_lea.vmem %s3, %s345
          %s347 = smul.u32 3, %s27
        $region32: #{wavenet_forward.10} parent=15 // pred_fallthru
          _
        // Predicated region
        $region33: #{wavenet_forward.10} parent=15 // pred_check
          %p348 = pneg %p157
        $region34: #{wavenet_forward.10} parent=15 // pred_check_branch
          %350 = sbr.rel (%p348) target = $region36
        $region35: #{wavenet_forward.10} parent=15 // pred_region
          %p351 = scmp.lt.s32.totalorder %s27, 2
          %s352 = scalar_select %p351, %s27, 2
          %s353 = smul.addr %s352, 2
          %s354 = smul.addr %s353, 4
          %s355 = scalar_lea.vmem %s4, %s354
        $region36: #{wavenet_forward.10} parent=15 // pred_fallthru
          _
        // Predicated region
        $region37: #{wavenet_forward.10} parent=15 // pred_check
          %p356 = pneg %p183
        $region38: #{wavenet_forward.10} parent=15 // pred_check_branch
          %358 = sbr.rel (%p356) target = $region40
        $region39: #{wavenet_forward.10} parent=15 // pred_region
          %p359 = scmp.lt.s32.totalorder %s27, 2
          %s360 = scalar_select %p359, %s27, 2
          %s361 = smul.addr %s360, 4
          %s362 = smul.addr %s361, 4
          %s363 = scalar_lea.vmem %s5, %s362
        $region40: #{wavenet_forward.10} parent=15 // pred_fallthru
          _
        // Predicated region
        $region41: #{wavenet_forward.10} parent=15 // pred_check
          %p364 = pneg %p209
        $region42: #{wavenet_forward.10} parent=15 // pred_check_branch
          %366 = sbr.rel (%p364) target = $region44
        $region43: #{wavenet_forward.10} parent=15 // pred_region
          %p367 = scmp.lt.s32.totalorder %s27, 2
          %s368 = scalar_select %p367, %s27, 2
          %s369 = scalar_lea.vmem %s6, %s368
        $region44: #{wavenet_forward.10} parent=15 // pred_fallthru
          _
        // Predicated region
        $region45: #{wavenet_forward.10} parent=15 // pred_check
          %p370 = pneg %p235
        $region46: #{wavenet_forward.10} parent=15 // pred_check_branch
          %372 = sbr.rel (%p370) target = $region48
        $region47: #{wavenet_forward.10} parent=15 // pred_region
          %p373 = scmp.lt.s32.totalorder %s27, 2
          %s374 = scalar_select %p373, %s27, 2
          %s375 = scalar_lea.vmem %s7, %s374
        $region48: #{wavenet_forward.10} parent=15 // pred_fallthru
          _
      $region16: #{wavenet_forward.10} parent=5 // pred_fallthru
        _
      %p376 = scmp.le.s32.totalorder 1, %s19
      %p377 = scmp.lt.s32.totalorder %s19, 7
      %p378 = pnand %p376, %p377
      %p379 = pneg %p378
      // Predicated region
      $region49: #{wavenet_forward.10} parent=5 // pred_check
        _
      $region50: #{wavenet_forward.10} parent=5 // pred_check_branch
        %381 = sbr.rel (%p378) target = $region52
      $region51: #{wavenet_forward.10} parent=5 // pred_region
        %s382 = ssub.s32 %s19, 1
        %p383 = scmp.lt.s32.totalorder %s28, 1
        %s384 = scalar_select %p383, %s28, 1
        %s385 = smul.addr %s384, 2
        %s386 = smul.addr %s385, 8
        %s387 = scalar_lea.vmem %s0, %s386
        %p388 = pneg %p57
        %p389 = pneg %p54
        %p390 = scmp.lt.s32.totalorder %s28, 1
        %s391 = scalar_select %p390, %s28, 1
        %s392 = smul.addr %s391, 2
        %s393 = smul.addr %s392, 4
        %s394 = scalar_lea.vmem %s1, %s393
        %p395 = pneg %p83
        %p396 = pneg %p80
        %p397 = scmp.lt.s32.totalorder %s28, 1
        %s398 = scalar_select %p397, %s28, 1
        %p399 = scmp.lt.s32.totalorder %s29, 2
        %s400 = scalar_select %p399, %s29, 2
        %s401 = smul.addr %s398, 3
        %s402 = sadd.s32 %s400, %s401
        %s403 = scalar_lea.vmem %s2, %s402
        %p404 = pneg %p111
        %p405 = pneg %p108
        %s406 = smul.u32 3, %s29
        %p407 = scmp.lt.s32.totalorder %s406, 8
        %s408 = scalar_select %p407, %s406, 8
        %s409 = smul.addr %s408, 4
        %s410 = smul.addr %s409, 4
        %s411 = scalar_lea.vmem %s3, %s410
        %p412 = pneg %p137
        %p413 = pneg %p134
        %p414 = scmp.lt.s32.totalorder %s29, 2
        %s415 = scalar_select %p414, %s29, 2
        %s416 = smul.addr %s415, 2
        %s417 = smul.addr %s416, 4
        %s418 = scalar_lea.vmem %s4, %s417
        %p419 = pneg %p163
        %p420 = pneg %p160
        %p421 = scmp.lt.s32.totalorder %s29, 2
        %s422 = scalar_select %p421, %s29, 2
        %s423 = smul.addr %s422, 4
        %s424 = smul.addr %s423, 4
        %s425 = scalar_lea.vmem %s5, %s424
        %p426 = pneg %p189
        %p427 = pneg %p186
        %p428 = scmp.lt.s32.totalorder %s29, 2
        %s429 = scalar_select %p428, %s29, 2
        %s430 = scalar_lea.vmem %s6, %s429
        %p431 = pneg %p215
        %p432 = pneg %p212
        %p433 = scmp.lt.s32.totalorder %s29, 2
        %s434 = scalar_select %p433, %s29, 2
        %s435 = scalar_lea.vmem %s7, %s434
        %p436 = pneg %p241
        %p437 = pneg %p238
        %p438 = pneg %p267
        %p439 = pneg %p264
        %s440 = sand.u32 %s254, 1
        %s441 = scalar_lea.sflag [#allocation3], %s440
        %s442 = sand.u32 %s254, 1
        %s443 = smul.addr %s442, 16
        %s444 = scalar_lea.vmem [#allocation2], %s443
        %p445 = pneg %p293
        %p446 = pneg %p290
        %p447 = scmp.lt.s32.totalorder %s28, 1
        %s448 = scalar_select %p447, %s28, 1
        %s449 = smul.addr %s448, 2
        %s450 = smul.addr %s449, 8
        %s451 = scalar_lea.vmem %s9, %s450
        %p452 = scmp.lt.s32.totalorder %s28, 1
        %s453 = scalar_select %p452, %s28, 1
        %s454 = smul.addr %s453, 2
        %s455 = smul.addr %s454, 8
        %s456 = scalar_lea.vmem %s0, %s455
        %p457 = scmp.lt.s32.totalorder %s28, 1
        %s458 = scalar_select %p457, %s28, 1
        %s459 = smul.addr %s458, 2
        %s460 = smul.addr %s459, 4
        %s461 = scalar_lea.vmem %s1, %s460
        %p462 = scmp.lt.s32.totalorder %s28, 1
        %s463 = scalar_select %p462, %s28, 1
        %p464 = scmp.lt.s32.totalorder %s29, 2
        %s465 = scalar_select %p464, %s29, 2
        %s466 = smul.addr %s463, 3
        %s467 = sadd.s32 %s465, %s466
        %s468 = scalar_lea.vmem %s2, %s467
        %s469 = smul.u32 3, %s29
        %p470 = scmp.lt.s32.totalorder %s469, 8
        %s471 = scalar_select %p470, %s469, 8
        %s472 = smul.addr %s471, 4
        %s473 = smul.addr %s472, 4
        %s474 = scalar_lea.vmem %s3, %s473
        %s475 = smul.u32 3, %s29
        %p476 = scmp.lt.s32.totalorder %s29, 2
        %s477 = scalar_select %p476, %s29, 2
        %s478 = smul.addr %s477, 2
        %s479 = smul.addr %s478, 4
        %s480 = scalar_lea.vmem %s4, %s479
        %p481 = scmp.lt.s32.totalorder %s29, 2
        %s482 = scalar_select %p481, %s29, 2
        %s483 = smul.addr %s482, 4
        %s484 = smul.addr %s483, 4
        %s485 = scalar_lea.vmem %s5, %s484
        %p486 = scmp.lt.s32.totalorder %s29, 2
        %s487 = scalar_select %p486, %s29, 2
        %s488 = scalar_lea.vmem %s6, %s487
        %p489 = scmp.lt.s32.totalorder %s29, 2
        %s490 = scalar_select %p489, %s29, 2
        %s491 = scalar_lea.vmem %s7, %s490
        %p492 = scmp.lt.s32.totalorder %s28, 1
        %s493 = scalar_select %p492, %s28, 1
        %s494 = smul.addr %s493, 2
        %s495 = smul.addr %s494, 8
        %s496 = scalar_lea.vmem %s9, %s495
        %p498 = scmp.eq.s32.totalorder %s29, 0
        // Predicated region
        $region53: #{wavenet_forward.10} parent=51 // pred_check
          %p499 = pneg %p498
        $region54: #{wavenet_forward.10} parent=51 // pred_check_branch
          %501 = sbr.rel (%p499) target = $region56
        $region55: #{wavenet_forward.10} parent=51 // pred_region
          %v502 = vld [vmem:[%s456] sm:$0xff]
          %v503 = vld [vmem:[%s456 + $0x8] sm:$0xff]
          %vm504 = vcmask 261120
          %505 = vst.msk [vmem:[%s444] sm:$0xff] %vm504, %v502
          %506 = vst.msk [vmem:[%s444 + $0x8] sm:$0xff] %vm504, %v503
          %507 = vst.msk [vmem:[%s496] sm:$0xff] %vm504, 0.0
          %508 = vst.msk [vmem:[%s496 + $0x8] sm:$0xff] %vm504, 0.0
        $region56: #{wavenet_forward.10} parent=51 // pred_fallthru
          _
        %v509 = vld [vmem:[%s444] sm:$0xff]
        %v510 = vld [vmem:[%s444 + $0x8] sm:$0xff]
        %v511 = vld [vmem:[%s468] sm:$0x1]
        %v513 = vlaneseq
        %v514 = vshrl.u32 %v513, 7
        %v515 = vsub.s32 0, %v514
        %v516 = vrot.slane %v511, %v515
        %v518 = vadd.f32 %v509, %v516
        %v519 = vadd.f32 %v510, %v516
        %v520 = vlaneseq
        %v521 = vshrl.u32 %v520, 7
        %v522 = vadd.s32 %v521, 8
        %vm523 = vcmp.eq.s32.totalorder %v521, 0
        %vm524 = vcmp.eq.s32.totalorder %v522, 0
        %v525 = vrot.slane %v518, 7
        %v526 = vrot.slane %v519, 7
        %vm527 = vcmp.lt.s32.totalorder %v521, 1
        %v528 = vsel %vm527, %v525, %v526
        %v529 = vsel %vm527, %v526, %v525
        %v530 = vsel %vm523, 1, 0
        %v531 = vsel %vm524, 1, 0
        %vm532 = vcmp.eq.s32.totalorder %v530, 1
        %vm533 = vcmp.eq.s32.totalorder %v531, 1
        %v534 = vsel %vm532, 0.0, %v529
        %v535 = vsel %vm533, 0.0, %v528
        %vm536 = vcmp.eq.s32.totalorder %v521, 15
        %vm537 = vcmp.eq.s32.totalorder %v522, 15
        %v538 = vrot.slane %v518, 1
        %v539 = vrot.slane %v519, 1
        %vm540 = vcmp.lt.s32.totalorder %v521, 7
        %v541 = vsel %vm540, %v538, %v539
        %v542 = vsel %vm540, %v539, %v538
        %v543 = vsel %vm536, 1, 0
        %v544 = vsel %vm537, 1, 0
        %vm545 = vcmp.eq.s32.totalorder %v543, 1
        %vm546 = vcmp.eq.s32.totalorder %v544, 1
        %v547 = vsel %vm545, 0.0, %v541
        %v548 = vsel %vm546, 0.0, %v542
        %v549 = vpack.c.bf16 %v535, %v534
        %v550 = vld [vmem:[%s474] sm:$0xf]
        %v551 = vld [vmem:[%s474 + $0x4] sm:$0xf]
        %v552 = vld [vmem:[%s474 + $0x8] sm:$0xf]
        %v553 = vld [vmem:[%s474 + $0xc] sm:$0xf]
        %v554 = vpack.c.bf16 %v519, %v518
        %s555 = scalar_lea.vmem %s474, 16
        %v556 = vld [vmem:[%s555] sm:$0xf]
        %v557 = vld [vmem:[%s555 + $0x4] sm:$0xf]
        %v558 = vld [vmem:[%s555 + $0x8] sm:$0xf]
        %v559 = vld [vmem:[%s555 + $0xc] sm:$0xf]
        %v564 = vunpack.c.l.b16 %v556
        %v565 = vunpack.c.l.b16 %v557
        %v566 = vunpack.c.l.b16 %v558
        %v567 = vunpack.c.l.b16 %v559
        %v568 = vpack.c.b16 %v565, %v564
        %v569 = vpack.c.b16 %v567, %v566
        %vm572 = vcmask 261120
        %v574 = vsel %vm572, %v554, 0
        %576 = vmatprep.subr.bf16.mxu0 0
        %577 = vmatpush1.bf16.msra.mxu0 %v568
        %578 = vmatprep.subr.bf16.mxu0 0
        %579 = vmatpush1.bf16.msra.mxu0 %v569
        %580 = vmatprep.subr.bf16.mxu0 0
        %581 = vmatpush1.bf16.msra.mxu0 0
        %582 = vmatprep.subr.bf16.mxu0 0
        %583 = vmatpush1.bf16.msra.mxu0 0
        %584 = vmatprep.subr.bf16.mxu0 0
        %585 = vmatpush1.bf16.msra.mxu0 0
        %586 = vmatprep.subr.bf16.mxu0 0
        %587 = vmatpush1.bf16.msra.mxu0 0
        %588 = vmatprep.subr.bf16.mxu0 0
        %589 = vmatpush1.bf16.msra.mxu0 0
        %590 = vmatprep.subr.bf16.mxu0 0
        %591 = vmatpush1.bf16.msra.mxu0 0
        %592 = vmatprep.subr.bf16.mxu0 0
        %593 = vmatpush1.bf16.msra.mxu0 0
        %594 = vmatprep.subr.bf16.mxu0 0
        %595 = vmatpush1.bf16.msra.mxu0 0
        %596 = vmatprep.subr.bf16.mxu0 0
        %597 = vmatpush1.bf16.msra.mxu0 0
        %598 = vmatprep.subr.bf16.mxu0 0
        %599 = vmatpush1.bf16.msra.mxu0 0
        %600 = vmatprep.subr.bf16.mxu0 0
        %601 = vmatpush1.bf16.msra.mxu0 0
        %602 = vmatprep.subr.bf16.mxu0 0
        %603 = vmatpush1.bf16.msra.mxu0 0
        %604 = vmatprep.subr.bf16.mxu0 0
        %605 = vmatpush1.bf16.msra.mxu0 0
        %606 = vmatprep.subr.bf16.mxu0 0
        %607 = vmatpush1.bf16.msra.mxu0 0
        %608 = vmatprep.mubr.bf16.mxu0 0
        %609 = vmatmul.mubr.bf16.gmra.mrb[0].mxu0 %v574
        %v610 = vpop.f32.mrb[0].mxu0
        %v611 = vadd.f32 0.0, %v610
        %v612 = vpop.f32.mrb[0].mxu0
        %v613 = vpop.f32.mrb[0].mxu0
        %v614 = vadd.f32 0.0, %v613
        %v615 = vpop.f32.mrb[0].mxu0
        %616 = vdwg.mxu0
        %v621 = vunpack.c.l.b16 %v550
        %v622 = vunpack.c.l.b16 %v551
        %v623 = vunpack.c.l.b16 %v552
        %v624 = vunpack.c.l.b16 %v553
        %v625 = vpack.c.b16 %v622, %v621
        %v626 = vpack.c.b16 %v624, %v623
        %v630 = vsel %vm572, %v549, 0
        %632 = vmatprep.subr.bf16.mxu0 0
        %633 = vmatpush1.bf16.msra.mxu0 %v625
        %634 = vmatprep.subr.bf16.mxu0 0
        %635 = vmatpush1.bf16.msra.mxu0 %v626
        %636 = vmatprep.subr.bf16.mxu0 0
        %637 = vmatpush1.bf16.msra.mxu0 0
        %638 = vmatprep.subr.bf16.mxu0 0
        %639 = vmatpush1.bf16.msra.mxu0 0
        %640 = vmatprep.subr.bf16.mxu0 0
        %641 = vmatpush1.bf16.msra.mxu0 0
        %642 = vmatprep.subr.bf16.mxu0 0
        %643 = vmatpush1.bf16.msra.mxu0 0
        %644 = vmatprep.subr.bf16.mxu0 0
        %645 = vmatpush1.bf16.msra.mxu0 0
        %646 = vmatprep.subr.bf16.mxu0 0
        %647 = vmatpush1.bf16.msra.mxu0 0
        %648 = vmatprep.subr.bf16.mxu0 0
        %649 = vmatpush1.bf16.msra.mxu0 0
        %650 = vmatprep.subr.bf16.mxu0 0
        %651 = vmatpush1.bf16.msra.mxu0 0
        %652 = vmatprep.subr.bf16.mxu0 0
        %653 = vmatpush1.bf16.msra.mxu0 0
        %654 = vmatprep.subr.bf16.mxu0 0
        %655 = vmatpush1.bf16.msra.mxu0 0
        %656 = vmatprep.subr.bf16.mxu0 0
        %657 = vmatpush1.bf16.msra.mxu0 0
        %658 = vmatprep.subr.bf16.mxu0 0
        %659 = vmatpush1.bf16.msra.mxu0 0
        %660 = vmatprep.subr.bf16.mxu0 0
        %661 = vmatpush1.bf16.msra.mxu0 0
        %662 = vmatprep.subr.bf16.mxu0 0
        %663 = vmatpush1.bf16.msra.mxu0 0
        %664 = vmatprep.mubr.bf16.mxu0 0
        %665 = vmatmul.mubr.bf16.gmra.mrb[0].mxu0 %v630
        %v666 = vpop.f32.mrb[0].mxu0
        %v667 = vadd.f32 %v611, %v666
        %v668 = vpop.f32.mrb[0].mxu0
        %v669 = vpop.f32.mrb[0].mxu0
        %v670 = vadd.f32 %v614, %v669
        %v671 = vpop.f32.mrb[0].mxu0
        %672 = vdwg.mxu0
        %v673 = vpack.c.bf16 %v548, %v547
        %s674 = scalar_lea.vmem %s474, 32
        %v675 = vld [vmem:[%s674] sm:$0xf]
        %v676 = vld [vmem:[%s674 + $0x4] sm:$0xf]
        %v677 = vld [vmem:[%s674 + $0x8] sm:$0xf]
        %v678 = vld [vmem:[%s674 + $0xc] sm:$0xf]
        %v683 = vunpack.c.l.b16 %v675
        %v684 = vunpack.c.l.b16 %v676
        %v685 = vunpack.c.l.b16 %v677
        %v686 = vunpack.c.l.b16 %v678
        %v687 = vpack.c.b16 %v684, %v683
        %v688 = vpack.c.b16 %v686, %v685
        %v692 = vsel %vm572, %v673, 0
        %694 = vmatprep.subr.bf16.mxu0 0
        %695 = vmatpush1.bf16.msra.mxu0 %v687
        %696 = vmatprep.subr.bf16.mxu0 0
        %697 = vmatpush1.bf16.msra.mxu0 %v688
        %698 = vmatprep.subr.bf16.mxu0 0
        %699 = vmatpush1.bf16.msra.mxu0 0
        %700 = vmatprep.subr.bf16.mxu0 0
        %701 = vmatpush1.bf16.msra.mxu0 0
        %702 = vmatprep.subr.bf16.mxu0 0
        %703 = vmatpush1.bf16.msra.mxu0 0
        %704 = vmatprep.subr.bf16.mxu0 0
        %705 = vmatpush1.bf16.msra.mxu0 0
        %706 = vmatprep.subr.bf16.mxu0 0
        %707 = vmatpush1.bf16.msra.mxu0 0
        %708 = vmatprep.subr.bf16.mxu0 0
        %709 = vmatpush1.bf16.msra.mxu0 0
        %710 = vmatprep.subr.bf16.mxu0 0
        %711 = vmatpush1.bf16.msra.mxu0 0
        %712 = vmatprep.subr.bf16.mxu0 0
        %713 = vmatpush1.bf16.msra.mxu0 0
        %714 = vmatprep.subr.bf16.mxu0 0
        %715 = vmatpush1.bf16.msra.mxu0 0
        %716 = vmatprep.subr.bf16.mxu0 0
        %717 = vmatpush1.bf16.msra.mxu0 0
        %718 = vmatprep.subr.bf16.mxu0 0
        %719 = vmatpush1.bf16.msra.mxu0 0
        %720 = vmatprep.subr.bf16.mxu0 0
        %721 = vmatpush1.bf16.msra.mxu0 0
        %722 = vmatprep.subr.bf16.mxu0 0
        %723 = vmatpush1.bf16.msra.mxu0 0
        %724 = vmatprep.subr.bf16.mxu0 0
        %725 = vmatpush1.bf16.msra.mxu0 0
        %726 = vmatprep.mubr.bf16.mxu0 0
        %727 = vmatmul.mubr.bf16.gmra.mrb[0].mxu0 %v692
        %v728 = vpop.f32.mrb[0].mxu0
        %v729 = vadd.f32 0.0, %v728
        %v730 = vpop.f32.mrb[0].mxu0
        %v731 = vpop.f32.mrb[0].mxu0
        %v732 = vadd.f32 0.0, %v731
        %v733 = vpop.f32.mrb[0].mxu0
        %734 = vdwg.mxu0
        %v735 = vadd.f32 %v667, %v729
        %v736 = vadd.f32 %v670, %v732
        %v737 = vld [vmem:[%s461] sm:$0xf]
        %v738 = vld [vmem:[%s461 + $0x4] sm:$0xf]
        %v739 = vld [vmem:[%s480] sm:$0xf]
        %v740 = vld [vmem:[%s480 + $0x4] sm:$0xf]
        %v743 = vunpack.c.l.b16 %v737
        %v744 = vunpack.c.l.b16 %v738
        %v745 = vpack.c.b16 %v744, %v743
        %v748 = vunpack.c.l.b16 %v739
        %v749 = vunpack.c.l.b16 %v740
        %v750 = vpack.c.b16 %v749, %v748
        %vm752 = vcmask 130048
        %v754 = vsel %vm752, %v745, 0
        %756 = vmatprep.subr.bf16.mxu0 0
        %757 = vmatpush1.bf16.msra.mxu0 %v750
        %758 = vmatprep.subr.bf16.mxu0 0
        %759 = vmatpush1.bf16.msra.mxu0 0
        %760 = vmatprep.subr.bf16.mxu0 0
        %761 = vmatpush1.bf16.msra.mxu0 0
        %762 = vmatprep.subr.bf16.mxu0 0
        %763 = vmatpush1.bf16.msra.mxu0 0
        %764 = vmatprep.subr.bf16.mxu0 0
        %765 = vmatpush1.bf16.msra.mxu0 0
        %766 = vmatprep.subr.bf16.mxu0 0
        %767 = vmatpush1.bf16.msra.mxu0 0
        %768 = vmatprep.subr.bf16.mxu0 0
        %769 = vmatpush1.bf16.msra.mxu0 0
        %770 = vmatprep.subr.bf16.mxu0 0
        %771 = vmatpush1.bf16.msra.mxu0 0
        %772 = vmatprep.subr.bf16.mxu0 0
        %773 = vmatpush1.bf16.msra.mxu0 0
        %774 = vmatprep.subr.bf16.mxu0 0
        %775 = vmatpush1.bf16.msra.mxu0 0
        %776 = vmatprep.subr.bf16.mxu0 0
        %777 = vmatpush1.bf16.msra.mxu0 0
        %778 = vmatprep.subr.bf16.mxu0 0
        %779 = vmatpush1.bf16.msra.mxu0 0
        %780 = vmatprep.subr.bf16.mxu0 0
        %781 = vmatpush1.bf16.msra.mxu0 0
        %782 = vmatprep.subr.bf16.mxu0 0
        %783 = vmatpush1.bf16.msra.mxu0 0
        %784 = vmatprep.subr.bf16.mxu0 0
        %785 = vmatpush1.bf16.msra.mxu0 0
        %786 = vmatprep.subr.bf16.mxu0 0
        %787 = vmatpush1.bf16.msra.mxu0 0
        %788 = vmatprep.mubr.bf16.mxu0 0
        %789 = vmatmul.mubr.bf16.gmra.mrb[0].mxu0 %v754
        %v790 = vpop.f32.mrb[0].mxu0
        %v791 = vadd.f32 0.0, %v790
        %v792 = vpop.f32.mrb[0].mxu0
        %v793 = vpop.f32.mrb[0].mxu0
        %v794 = vadd.f32 0.0, %v793
        %v795 = vpop.f32.mrb[0].mxu0
        %796 = vdwg.mxu0
        %v797 = vadd.f32 %v735, %v791
        %v798 = vadd.f32 %v736, %v794
        %v799 = vld [vmem:[%s488] sm:$0x1]
        %v801 = vlaneseq
        %v802 = vshrl.u32 %v801, 7
        %v803 = vsub.s32 0, %v802
        %v804 = vrot.slane %v799, %v803
        %v806 = vadd.f32 %v797, %v804
        %v807 = vadd.f32 %v798, %v804
        %v808 = vxor.u32 %v806, 2147483648
        %v809 = vxor.u32 %v807, 2147483648
        %v810 = vmul.f32 %v808, 1.442695
        %v811 = vpow.pop %v810
        %v812 = vmul.f32 %v809, 1.442695
        %v813 = vpow.pop %v812
        %v814 = vadd.f32 %v811, 1.0
        %v815 = vadd.f32 %v813, 1.0
        %v816 = vrcp.pop %v814
        %v817 = vmul.f32 1.0, %v816
        %v818 = vrcp.pop %v815
        %v819 = vmul.f32 1.0, %v818
        %v820 = vtanh.pop %v806
        %v821 = vtanh.pop %v807
        %824 = vrot.lane.b32.xlu0 %v820, 96
        %v825 = vpop.permute.xlu0 %824
        %826 = vrot.lane.b32.xlu0 %v821, 96
        %v827 = vpop.permute.xlu0 %826
        %v830 = vmul.f32 %v817, %v825
        %v831 = vmul.f32 %v819, %v827
        %v832 = vpack.c.bf16 %v831, %v830
        %v833 = vld [vmem:[%s485] sm:$0xf]
        %v834 = vld [vmem:[%s485 + $0x4] sm:$0xf]
        %v835 = vld [vmem:[%s485 + $0x8] sm:$0xf]
        %v836 = vld [vmem:[%s485 + $0xc] sm:$0xf]
        %v837 = vld [vmem:[%s491] sm:$0x1]
        %v839 = vlaneseq
        %v840 = vshrl.u32 %v839, 7
        %v841 = vsub.s32 0, %v840
        %v842 = vrot.slane %v837, %v841
        %v848 = vunpack.c.l.b16 %v833
        %v849 = vunpack.c.l.b16 %v834
        %v850 = vunpack.c.l.b16 %v835
        %v851 = vunpack.c.l.b16 %v836
        %v852 = vpack.c.b16 %v849, %v848
        %v853 = vpack.c.b16 %v851, %v850
        %v857 = vsel %vm572, %v832, 0
        %859 = vmatprep.subr.bf16.mxu0 0
        %860 = vmatpush1.bf16.msra.mxu0 %v852
        %861 = vmatprep.subr.bf16.mxu0 0
        %862 = vmatpush1.bf16.msra.mxu0 %v853
        %863 = vmatprep.subr.bf16.mxu0 0
        %864 = vmatpush1.bf16.msra.mxu0 0
        %865 = vmatprep.subr.bf16.mxu0 0
        %866 = vmatpush1.bf16.msra.mxu0 0
        %867 = vmatprep.subr.bf16.mxu0 0
        %868 = vmatpush1.bf16.msra.mxu0 0
        %869 = vmatprep.subr.bf16.mxu0 0
        %870 = vmatpush1.bf16.msra.mxu0 0
        %871 = vmatprep.subr.bf16.mxu0 0
        %872 = vmatpush1.bf16.msra.mxu0 0
        %873 = vmatprep.subr.bf16.mxu0 0
        %874 = vmatpush1.bf16.msra.mxu0 0
        %875 = vmatprep.subr.bf16.mxu0 0
        %876 = vmatpush1.bf16.msra.mxu0 0
        %877 = vmatprep.subr.bf16.mxu0 0
        %878 = vmatpush1.bf16.msra.mxu0 0
        %879 = vmatprep.subr.bf16.mxu0 0
        %880 = vmatpush1.bf16.msra.mxu0 0
        %881 = vmatprep.subr.bf16.mxu0 0
        %882 = vmatpush1.bf16.msra.mxu0 0
        %883 = vmatprep.subr.bf16.mxu0 0
        %884 = vmatpush1.bf16.msra.mxu0 0
        %885 = vmatprep.subr.bf16.mxu0 0
        %886 = vmatpush1.bf16.msra.mxu0 0
        %887 = vmatprep.subr.bf16.mxu0 0
        %888 = vmatpush1.bf16.msra.mxu0 0
        %889 = vmatprep.subr.bf16.mxu0 0
        %890 = vmatpush1.bf16.msra.mxu0 0
        %891 = vmatprep.mubr.bf16.mxu0 0
        %892 = vmatmul.mubr.bf16.gmra.mrb[0].mxu0 %v857
        %v893 = vpop.f32.mrb[0].mxu0
        %v894 = vadd.f32 %v842, %v893
        %v895 = vpop.f32.mrb[0].mxu0
        %v896 = vpop.f32.mrb[0].mxu0
        %v897 = vadd.f32 %v842, %v896
        %v898 = vpop.f32.mrb[0].mxu0
        %899 = vdwg.mxu0
        %v900 = vadd.f32 %v509, %v894
        %v901 = vadd.f32 %v510, %v897
        %v902 = vmul.f32 %v900, 0.70710677
        %v903 = vmul.f32 %v901, 0.70710677
        %904 = vst.msk [vmem:[%s444] sm:$0xff] %vm572, %v902
        %905 = vst.msk [vmem:[%s444 + $0x8] sm:$0xff] %vm572, %v903
        %v906 = vld [vmem:[%s496] sm:$0xff]
        %v907 = vld [vmem:[%s496 + $0x8] sm:$0xff]
        %910 = vrot.lane.b32.xlu0 %v894, 96
        %v911 = vpop.permute.xlu0 %910
        %912 = vrot.lane.b32.xlu0 %v897, 96
        %v913 = vpop.permute.xlu0 %912
        %v916 = vadd.f32 %v906, %v911
        %v917 = vadd.f32 %v907, %v913
        %918 = vst.msk [vmem:[%s496] sm:$0xff] %vm572, %v916
        %919 = vst.msk [vmem:[%s496 + $0x8] sm:$0xff] %vm572, %v917
        %s920 = sand.u32 %s254, 1
        %s921 = scalar_lea.sflag [#allocation3], %s920
        %s922 = sand.u32 %s254, 1
        %s923 = smul.addr %s922, 16
        %s924 = scalar_lea.vmem [#allocation2], %s923
        %p925 = scmp.lt.s32.totalorder %s28, 1
        %s926 = scalar_select %p925, %s28, 1
        %s927 = smul.addr %s926, 2
        %s928 = smul.addr %s927, 8
        %s929 = scalar_lea.vmem %s9, %s928
        // Predicated region
        $region57: #{wavenet_forward.10} parent=51 // pred_check
          %p930 = pneg %p264
        $region58: #{wavenet_forward.10} parent=51 // pred_check_branch
          %932 = sbr.rel (%p930) target = $region60
        $region59: #{wavenet_forward.10} parent=51 // pred_region
          %s934 = ssub.s32 256, 256
          %935 = vsyncadd %s921, %s934
          %s936 = smul.addr %s28, 2
          %s937 = smul.addr %s936, 128
          %s938 = scalar_lea.hbm %s8, %s937
          %s939 = sshll.u32 %s924, 4
          %s940 = int_to_ptr.vmem [resolvable:$true] %s939
          %945 = dma.vmem_to_hbm [thread:$0]  %s940, 256, %s938, %s921, 128, 128, 8
        $region60: #{wavenet_forward.10} parent=51 // pred_fallthru
          _
        // Predicated region
        $region61: #{wavenet_forward.10} parent=51 // pred_check
          %p946 = pneg %p290
        $region62: #{wavenet_forward.10} parent=51 // pred_check_branch
          %948 = sbr.rel (%p946) target = $region64
        $region63: #{wavenet_forward.10} parent=51 // pred_region
          _
        $region64: #{wavenet_forward.10} parent=51 // pred_fallthru
          _
      $region52: #{wavenet_forward.10} parent=5 // pred_fallthru
        _
      %p949 = scmp.le.s32.totalorder 2, %s19
      // Predicated region
      $region65: #{wavenet_forward.10} parent=5 // pred_check
        %p950 = pneg %p949
      $region66: #{wavenet_forward.10} parent=5 // pred_check_branch
        %952 = sbr.rel (%p950) target = $region68
      $region67: #{wavenet_forward.10} parent=5 // pred_region
        %s953 = ssub.s32 %s19, 2
        // Predicated region
        $region69: #{wavenet_forward.10} parent=67 // pred_check
          %p954 = pneg %p270
        $region70: #{wavenet_forward.10} parent=67 // pred_check_branch
          %956 = sbr.rel (%p954) target = $region72
        $region71: #{wavenet_forward.10} parent=67 // pred_region
          %s957 = sand.u32 %s255, 1
          %s958 = scalar_lea.sflag [#allocation3], %s957
          %s959 = sand.u32 %s255, 1
          %s960 = smul.addr %s959, 16
          %s961 = scalar_lea.vmem [#allocation2], %s960
          %962 = dma.done %s958, 256
        $region72: #{wavenet_forward.10} parent=67 // pred_fallthru
          _
        // Predicated region
        $region73: #{wavenet_forward.10} parent=67 // pred_check
          %p963 = pneg %p296
        $region74: #{wavenet_forward.10} parent=67 // pred_check_branch
          %965 = sbr.rel (%p963) target = $region76
        $region75: #{wavenet_forward.10} parent=67 // pred_region
          %p966 = scmp.lt.s32.totalorder %s30, 1
          %s967 = scalar_select %p966, %s30, 1
          %s968 = smul.addr %s967, 2
          %s969 = smul.addr %s968, 8
          %s970 = scalar_lea.vmem %s9, %s969
        $region76: #{wavenet_forward.10} parent=67 // pred_fallthru
          _
      $region68: #{wavenet_forward.10} parent=5 // pred_fallthru
        _
    $region6: #{wavenet_forward.10} parent=1 // loop_footer
      %s23 = sadd.s32 1, %s19
    $region7: #{wavenet_forward.10} parent=1 // loop_footer_branch
      %18 = sbr.rel target = $region3
    $region8: #{wavenet_forward.10} parent=1 // loop_exit
      _
    %971 = vsyncpa [#allocation3], 1
    %s972 = scalar_lea.sflag [#allocation3], 1
    %973 = vsyncpa %s972, 1

</llo_original>
